<compile_context>
chip_gen: v5e
topology: v5e:2x2
jax: 0.10.0
libtpu: 0.0.40
codegen_flags: <defaults>
</compile_context>

<pallas_src>
import jax
import jax.numpy as jnp
from jax.experimental import pallas as pl
from jax.experimental.pallas import tpu as pltpu


def _round_up(x, m):
    return ((x + m - 1) // m) * m


def mlp_logsoftmax_kernel(x_ref, *refs):
    """Whole-network kernel for one batch tile:
    chained (bf16 matmul -> f32 acc -> +bias -> ReLU -> bf16), final matmul on
    a lane-padded output layer, then a numerically-stable log_softmax over the
    class (lane) axis.

    refs = (w0, b0, w1, b1, ..., w_last, b_last, o_ref)
    All layers except the last are followed by ReLU; the last by log_softmax.
    Padded output columns carry bias -1e30 (f32 only!) so exp()==0.
    """
    o_ref = refs[-1]
    wb = refs[:-1]
    n_total = len(wb) // 2

    # Cast fused into the load; running activation stays bf16 between layers.
    h = x_ref[...].astype(jnp.bfloat16)

    # Hidden stacks: Linear + ReLU (DNI BackwardInterface is identity in fwd).
    # NOTE(scaling guard): if n_layers / hidden_width grow, switch this
    # unrolled Python loop to a lax.fori_loop over a stacked [n_layers, H, H]
    # weight tensor (pl.ds per layer) to bound vreg live ranges.
    for i in range(n_total - 1):
        w = wb[2 * i][...]          # bf16 [in, out]
        b = wb[2 * i + 1][...]      # f32  [1, out]
        acc = jnp.dot(h, w, preferred_element_type=jnp.float32)
        h = jnp.maximum(acc + b, 0.0).astype(jnp.bfloat16)

    # Output layer: Linear (lane-padded), then log_softmax over dim=1.
    w_out = wb[-2][...]
    b_out = wb[-1][...]
    logits = jnp.dot(h, w_out, preferred_element_type=jnp.float32) + b_out

    m = jnp.max(logits, axis=1, keepdims=True)          # XLU lane reduce
    shifted = logits - m
    lse = jnp.log(jnp.sum(jnp.exp(shifted), axis=1, keepdims=True))  # EUP+XLU
    o_ref[...] = (shifted - lse).astype(o_ref.dtype)


def _pad_output_params(params, lane=128):
    """Pad the final layer's class dim up to a multiple of `lane` lanes.
    Padded columns: weights = 0, bias = -1e30 => exp(logit - max) == 0, so the
    log_softmax over the first `output_width` columns is unchanged.
    (The -1e30 bias is only safe because logits are accumulated in f32.)"""
    params = list(params)
    w_out, b_out = params[-1]
    out_width = w_out.shape[1]
    out_pad = _round_up(out_width, lane)
    if out_pad != out_width:
        pad = out_pad - out_width
        w_out = jnp.pad(w_out, ((0, 0), (0, pad)))
        b_out = jnp.pad(b_out, ((0, 0), (0, pad)), constant_values=-1e30)
        params[-1] = (w_out, b_out)
    return params, out_width, out_pad


def _choose_row_tile(B, block_rows):
    """Largest practical batch tile. Small batches -> single tile (one grid
    step). Larger batches -> biggest tile that still leaves >= 2 grid steps,
    so both v7x TensorCores get work while v5e/v6e amortize step overhead."""
    B8 = _round_up(B, 8)
    if B8 <= 128:
        return B8
    return min(block_rows, _round_up(pl.cdiv(B8, 2), 8))


def net_forward(x, params, *, block_rows=512, out_dtype=jnp.float32):
    """params: list of (w [in,out] bf16, b [1,out] f32) tuples, ordered:
    input_layer, hidden_layers..., output_layer."""
    B = x.shape[0]
    x_flat = x.reshape(B, -1)                    # matches torch x.view(B, -1)
    if x_flat.dtype not in (jnp.float32, jnp.bfloat16):
        x_flat = x_flat.astype(jnp.float32)      # bf16 inputs pass through as-is
    input_width = x_flat.shape[1]

    params_padded, out_width, out_pad = _pad_output_params(params)

    # Batch tiling: pad B up to a multiple of the row tile; padded zero rows
    # just run the network (finite values) and are sliced off afterwards.
    tm = _choose_row_tile(B, block_rows)
    B_pad = _round_up(B, tm)
    if B_pad != B:
        x_flat = jnp.pad(x_flat, ((0, B_pad - B), (0, 0)))
    grid = (B_pad // tm,)

    flat_params = []
    for w, b in params_padded:
        flat_params.append(w)
        flat_params.append(b)

    x_itemsize = jnp.dtype(x_flat.dtype).itemsize
    o_itemsize = jnp.dtype(out_dtype).itemsize
    p_bytes = sum(int(a.size) * a.dtype.itemsize for a in flat_params)
    max_w = max([input_width] + [int(w.shape[1]) for w, _ in params_padded])

    # Advisory cost hint for the XLA scheduler.
    flops = 2 * B_pad * sum(int(w.shape[0]) * int(w.shape[1])
                            for w, _ in params_padded)
    bytes_accessed = (B_pad * input_width * x_itemsize
                      + B_pad * out_pad * o_itemsize + p_bytes)
    cost = pl.CostEstimate(flops=flops, transcendentals=B_pad * out_pad,
                           bytes_accessed=bytes_accessed)

    def run(single_buffer_params):
        def param_spec(shape):
            # Constant (0,0) block index every grid step -> parameters stay
            # VMEM-resident; double-buffering them is pure waste.
            if single_buffer_params:
                return pl.BlockSpec(shape, lambda i: (0, 0),
                                    pipeline_mode=pl.Buffered(1))
            return pl.BlockSpec(shape, lambda i: (0, 0))

        in_specs = [pl.BlockSpec((tm, input_width), lambda i: (i, 0))]
        for w, b in params_padded:
            in_specs.append(param_spec(w.shape))
            in_specs.append(param_spec(b.shape))
        out_spec = pl.BlockSpec((tm, out_pad), lambda i: (i, 0))

        # Explicit scoped-VMEM limit: raises v5e's 16 MiB default, never above
        # v7x's 64 MiB physical VMEM.
        p_factor = 1 if single_buffer_params else 2
        vmem_need = (2 * tm * input_width * x_itemsize     # input, 2 buffers
                     + 2 * tm * out_pad * o_itemsize       # output, 2 buffers
                     + p_factor * p_bytes                   # resident params
                     + 6 * tm * max_w * 4)                  # f32 intermediates
        vmem_limit = int(min(max(vmem_need + (4 << 20), 32 << 20), 64 << 20))

        return pl.pallas_call(
            mlp_logsoftmax_kernel,
            out_shape=jax.ShapeDtypeStruct((B_pad, out_pad), out_dtype),
            grid=grid,
            in_specs=in_specs,
            out_specs=out_spec,
            compiler_params=pltpu.CompilerParams(
                dimension_semantics=("parallel",),   # megacore sharding on v7x
                vmem_limit_bytes=vmem_limit),
            cost_estimate=cost,
        )(x_flat, *flat_params)

    try:
        out = run(single_buffer_params=True)
    except Exception:
        # pl.Buffered(1) rejected by this jax/libtpu -> fall back to defaults.
        out = run(single_buffer_params=False)

    return out[:B, :out_width]


def init_params(key, input_width, hidden_width, n_layers, output_width):
    dims = [input_width, hidden_width]
    for _ in range(n_layers):
        dims.append(hidden_width)
    dims.append(output_width)

    params = []
    for i in range(len(dims) - 1):
        din, dout = dims[i], dims[i + 1]
        key, kw, kb = jax.random.split(key, 3)
        scale = 1.0 / jnp.sqrt(jnp.float32(din))
        w = (jax.random.normal(kw, (din, dout), dtype=jnp.float32)
             * scale).astype(jnp.bfloat16)                          # bf16 weights
        b = jax.random.normal(kb, (1, dout), dtype=jnp.float32) * 0.01  # f32 bias
        params.append((w, b))
    return params


def reference_forward(x, params):
    """Pure-JAX reference matching the kernel's numerics (bf16 operands,
    f32 accumulation)."""
    h = x.reshape(x.shape[0], -1).astype(jnp.float32)
    n = len(params)
    for i, (w, b) in enumerate(params):
        hb = h.astype(jnp.bfloat16).astype(jnp.float32)
        h = hb @ w.astype(jnp.float32) + b
        if i < n - 1:
            h = jnp.maximum(h, 0.0)
    return jax.nn.log_softmax(h, axis=1)


if __name__ == "__main__":
    # args.input_width = C*H*W, args.hidden_width, args.n_layers,
    # args.output_width. Batch chosen so the batch grid has 2 parallel tiles.
    B, C, H, W = 256, 4, 8, 8
    input_width = C * H * W      # 256
    hidden_width = 128
    n_layers = 2
    output_width = 10

    key = jax.random.PRNGKey(0)
    key, kx = jax.random.split(key)
    x = jax.random.normal(kx, (B, C, H, W), dtype=jnp.float32)

    # TODO(synk): DNI BackwardInterface / BasicSynthesizer is gradient-only
    # machinery (identity on activations); no forward-pass kernel is needed.
    params = init_params(key, input_width, hidden_width, n_layers, output_width)

    out = jax.block_until_ready(net_forward(x, params))

    ref = reference_forward(x, params)
    assert out.shape == (B, output_width)
    err = float(jnp.max(jnp.abs(out - ref)))
    assert jnp.allclose(out, ref, atol=2e-3, rtol=2e-3), err

    print("KERNEL_OK")
</pallas_src>

<mosaic_0001>
module attributes {stable_mosaic.version = 11 : i64} {
  func.func @mlp_logsoftmax_kernel(%arg0: i32, %arg1: memref<128x256xf32, #tpu.memory_space<vmem>>, %arg2: memref<256x128xbf16, #tpu.memory_space<vmem>>, %arg3: memref<1x128xf32, #tpu.memory_space<vmem>>, %arg4: memref<128x128xbf16, #tpu.memory_space<vmem>>, %arg5: memref<1x128xf32, #tpu.memory_space<vmem>>, %arg6: memref<128x128xbf16, #tpu.memory_space<vmem>>, %arg7: memref<1x128xf32, #tpu.memory_space<vmem>>, %arg8: memref<128x128xbf16, #tpu.memory_space<vmem>>, %arg9: memref<1x128xf32, #tpu.memory_space<vmem>>, %arg10: memref<128x128xf32, #tpu.memory_space<vmem>>) attributes {dimension_semantics = [#tpu.dimension_semantics<parallel>], iteration_bounds = array<i64: 2>, scalar_prefetch = 0 : i64, scratch_operands = 0 : i64, tpu.core_type = #tpu.core_type<tc>, window_params = [{transform_indices = @transform_0, window_bounds = array<i64: 128, 256>}, {pipeline_mode = #tpu.pipeline_mode<synchronous>, transform_indices = @transform_1, window_bounds = array<i64: 256, 128>}, {pipeline_mode = #tpu.pipeline_mode<synchronous>, transform_indices = @transform_2, window_bounds = array<i64: 1, 128>}, {pipeline_mode = #tpu.pipeline_mode<synchronous>, transform_indices = @transform_3, window_bounds = array<i64: 128, 128>}, {pipeline_mode = #tpu.pipeline_mode<synchronous>, transform_indices = @transform_4, window_bounds = array<i64: 1, 128>}, {pipeline_mode = #tpu.pipeline_mode<synchronous>, transform_indices = @transform_5, window_bounds = array<i64: 128, 128>}, {pipeline_mode = #tpu.pipeline_mode<synchronous>, transform_indices = @transform_6, window_bounds = array<i64: 1, 128>}, {pipeline_mode = #tpu.pipeline_mode<synchronous>, transform_indices = @transform_7, window_bounds = array<i64: 128, 128>}, {pipeline_mode = #tpu.pipeline_mode<synchronous>, transform_indices = @transform_8, window_bounds = array<i64: 1, 128>}, {transform_indices = @transform_9, window_bounds = array<i64: 128, 128>}]} {
    %c0 = arith.constant 0 : index
    %c0_0 = arith.constant 0 : index
    %0 = vector.load %arg1[%c0, %c0_0] : memref<128x256xf32, #tpu.memory_space<vmem>>, vector<128x256xf32>
    %1 = arith.truncf %0 : vector<128x256xf32> to vector<128x256xbf16>
    %c0_1 = arith.constant 0 : index
    %c0_2 = arith.constant 0 : index
    %2 = vector.load %arg2[%c0_1, %c0_2] : memref<256x128xbf16, #tpu.memory_space<vmem>>, vector<256x128xbf16>
    %c0_3 = arith.constant 0 : index
    %c0_4 = arith.constant 0 : index
    %3 = vector.load %arg3[%c0_3, %c0_4] : memref<1x128xf32, #tpu.memory_space<vmem>>, vector<1x128xf32>
    %cst = arith.constant dense<0.000000e+00> : vector<128x128xf32>
    %4 = tpu.matmul %1, %2, %cst {dimension_numbers = #tpu.dot_dimension_numbers<[1], [0], [0], [1], [0, 0, 1, 1], [], []>} : vector<128x256xbf16>, vector<256x128xbf16>, vector<128x128xf32> -> vector<128x128xf32>
    %5 = vector.broadcast %3 : vector<1x128xf32> to vector<128x128xf32>
    %6 = arith.addf %4, %5 : vector<128x128xf32>
    %cst_5 = arith.constant 0.000000e+00 : f32
    %7 = vector.broadcast %cst_5 : f32 to vector<128x128xf32>
    %8 = arith.maximumf %6, %7 : vector<128x128xf32>
    %9 = arith.truncf %8 : vector<128x128xf32> to vector<128x128xbf16>
    %c0_6 = arith.constant 0 : index
    %c0_7 = arith.constant 0 : index
    %10 = vector.load %arg4[%c0_6, %c0_7] : memref<128x128xbf16, #tpu.memory_space<vmem>>, vector<128x128xbf16>
    %c0_8 = arith.constant 0 : index
    %c0_9 = arith.constant 0 : index
    %11 = vector.load %arg5[%c0_8, %c0_9] : memref<1x128xf32, #tpu.memory_space<vmem>>, vector<1x128xf32>
    %cst_10 = arith.constant dense<0.000000e+00> : vector<128x128xf32>
    %12 = tpu.matmul %9, %10, %cst_10 {dimension_numbers = #tpu.dot_dimension_numbers<[1], [0], [0], [1], [0, 0, 1, 1], [], []>} : vector<128x128xbf16>, vector<128x128xbf16>, vector<128x128xf32> -> vector<128x128xf32>
    %13 = vector.broadcast %11 : vector<1x128xf32> to vector<128x128xf32>
    %14 = arith.addf %12, %13 : vector<128x128xf32>
    %cst_11 = arith.constant 0.000000e+00 : f32
    %15 = vector.broadcast %cst_11 : f32 to vector<128x128xf32>
    %16 = arith.maximumf %14, %15 : vector<128x128xf32>
    %17 = arith.truncf %16 : vector<128x128xf32> to vector<128x128xbf16>
    %c0_12 = arith.constant 0 : index
    %c0_13 = arith.constant 0 : index
    %18 = vector.load %arg6[%c0_12, %c0_13] : memref<128x128xbf16, #tpu.memory_space<vmem>>, vector<128x128xbf16>
    %c0_14 = arith.constant 0 : index
    %c0_15 = arith.constant 0 : index
    %19 = vector.load %arg7[%c0_14, %c0_15] : memref<1x128xf32, #tpu.memory_space<vmem>>, vector<1x128xf32>
    %cst_16 = arith.constant dense<0.000000e+00> : vector<128x128xf32>
    %20 = tpu.matmul %17, %18, %cst_16 {dimension_numbers = #tpu.dot_dimension_numbers<[1], [0], [0], [1], [0, 0, 1, 1], [], []>} : vector<128x128xbf16>, vector<128x128xbf16>, vector<128x128xf32> -> vector<128x128xf32>
    %21 = vector.broadcast %19 : vector<1x128xf32> to vector<128x128xf32>
    %22 = arith.addf %20, %21 : vector<128x128xf32>
    %cst_17 = arith.constant 0.000000e+00 : f32
    %23 = vector.broadcast %cst_17 : f32 to vector<128x128xf32>
    %24 = arith.maximumf %22, %23 : vector<128x128xf32>
    %25 = arith.truncf %24 : vector<128x128xf32> to vector<128x128xbf16>
    %c0_18 = arith.constant 0 : index
    %c0_19 = arith.constant 0 : index
    %26 = vector.load %arg8[%c0_18, %c0_19] : memref<128x128xbf16, #tpu.memory_space<vmem>>, vector<128x128xbf16>
    %c0_20 = arith.constant 0 : index
    %c0_21 = arith.constant 0 : index
    %27 = vector.load %arg9[%c0_20, %c0_21] : memref<1x128xf32, #tpu.memory_space<vmem>>, vector<1x128xf32>
    %cst_22 = arith.constant dense<0.000000e+00> : vector<128x128xf32>
    %28 = tpu.matmul %25, %26, %cst_22 {dimension_numbers = #tpu.dot_dimension_numbers<[1], [0], [0], [1], [0, 0, 1, 1], [], []>} : vector<128x128xbf16>, vector<128x128xbf16>, vector<128x128xf32> -> vector<128x128xf32>
    %29 = vector.broadcast %27 : vector<1x128xf32> to vector<128x128xf32>
    %30 = arith.addf %28, %29 : vector<128x128xf32>
    %cst_23 = arith.constant dense<0xFF800000> : vector<128xf32>
    %31 = vector.multi_reduction <maximumf>, %30, %cst_23 [1] : vector<128x128xf32> to vector<128xf32>
    %32 = vector.shape_cast %31 : vector<128xf32> to vector<128x1xf32>
    %33 = vector.broadcast %32 : vector<128x1xf32> to vector<128x128xf32>
    %34 = arith.subf %30, %33 : vector<128x128xf32>
    %35 = math.exp %34 : vector<128x128xf32>
    %cst_24 = arith.constant dense<0.000000e+00> : vector<128xf32>
    %36 = vector.multi_reduction <add>, %35, %cst_24 [1] : vector<128x128xf32> to vector<128xf32>
    %37 = vector.shape_cast %36 : vector<128xf32> to vector<128x1xf32>
    %38 = math.log %37 : vector<128x1xf32>
    %39 = vector.broadcast %38 : vector<128x1xf32> to vector<128x128xf32>
    %40 = arith.subf %34, %39 : vector<128x128xf32>
    %c0_25 = arith.constant 0 : index
    %c0_26 = arith.constant 0 : index
    %41 = vector.load %arg10[%c0_25, %c0_26] : memref<128x128xf32, #tpu.memory_space<vmem>>, vector<128x128xf32>
    tpu.vector_store %arg10[%c0_25, %c0_26], %40 {strides = array<i32>} : memref<128x128xf32, #tpu.memory_space<vmem>>, vector<128x128xf32>,
    return
  }
  func.func @transform_0(%arg0: i32) -> (i32, i32) {
    %c0_i32 = arith.constant 0 : i32
    %c0_i32_0 = arith.constant 0 : i32
    return %arg0, %c0_i32 : i32, i32
  }
  func.func @transform_1(%arg0: i32) -> (i32, i32) {
    %c0_i32 = arith.constant 0 : i32
    %c0_i32_0 = arith.constant 0 : i32
    %c0_i32_1 = arith.constant 0 : i32
    return %c0_i32, %c0_i32_0 : i32, i32
  }
  func.func @transform_2(%arg0: i32) -> (i32, i32) {
    %c0_i32 = arith.constant 0 : i32
    %c0_i32_0 = arith.constant 0 : i32
    %c0_i32_1 = arith.constant 0 : i32
    return %c0_i32, %c0_i32_0 : i32, i32
  }
  func.func @transform_3(%arg0: i32) -> (i32, i32) {
    %c0_i32 = arith.constant 0 : i32
    %c0_i32_0 = arith.constant 0 : i32
    %c0_i32_1 = arith.constant 0 : i32
    return %c0_i32, %c0_i32_0 : i32, i32
  }
  func.func @transform_4(%arg0: i32) -> (i32, i32) {
    %c0_i32 = arith.constant 0 : i32
    %c0_i32_0 = arith.constant 0 : i32
    %c0_i32_1 = arith.constant 0 : i32
    return %c0_i32, %c0_i32_0 : i32, i32
  }
  func.func @transform_5(%arg0: i32) -> (i32, i32) {
    %c0_i32 = arith.constant 0 : i32
    %c0_i32_0 = arith.constant 0 : i32
    %c0_i32_1 = arith.constant 0 : i32
    return %c0_i32, %c0_i32_0 : i32, i32
  }
  func.func @transform_6(%arg0: i32) -> (i32, i32) {
    %c0_i32 = arith.constant 0 : i32
    %c0_i32_0 = arith.constant 0 : i32
    %c0_i32_1 = arith.constant 0 : i32
    return %c0_i32, %c0_i32_0 : i32, i32
  }
  func.func @transform_7(%arg0: i32) -> (i32, i32) {
    %c0_i32 = arith.constant 0 : i32
    %c0_i32_0 = arith.constant 0 : i32
    %c0_i32_1 = arith.constant 0 : i32
    return %c0_i32, %c0_i32_0 : i32, i32
  }
  func.func @transform_8(%arg0: i32) -> (i32, i32) {
    %c0_i32 = arith.constant 0 : i32
    %c0_i32_0 = arith.constant 0 : i32
    %c0_i32_1 = arith.constant 0 : i32
    return %c0_i32, %c0_i32_0 : i32, i32
  }
  func.func @transform_9(%arg0: i32) -> (i32, i32) {
    %c0_i32 = arith.constant 0 : i32
    %c0_i32_0 = arith.constant 0 : i32
    return %arg0, %c0_i32 : i32, i32
  }
}

module attributes {stable_mosaic.version = 11 : i64} {
  func.func @mlp_logsoftmax_kernel(%arg0: i32, %arg1: memref<128x256xf32, #tpu.memory_space<vmem>>, %arg2: memref<256x128xbf16, #tpu.memory_space<vmem>>, %arg3: memref<1x128xf32, #tpu.memory_space<vmem>>, %arg4: memref<128x128xbf16, #tpu.memory_space<vmem>>, %arg5: memref<1x128xf32, #tpu.memory_space<vmem>>, %arg6: memref<128x128xbf16, #tpu.memory_space<vmem>>, %arg7: memref<1x128xf32, #tpu.memory_space<vmem>>, %arg8: memref<128x128xbf16, #tpu.memory_space<vmem>>, %arg9: memref<1x128xf32, #tpu.memory_space<vmem>>, %arg10: memref<128x128xf32, #tpu.memory_space<vmem>>) attributes {dimension_semantics = [#tpu.dimension_semantics<parallel>], iteration_bounds = array<i64: 2>, scalar_prefetch = 0 : i64, scratch_operands = 0 : i64, tpu.core_type = #tpu.core_type<tc>, window_params = [{transform_indices = @transform_0, window_bounds = array<i64: 128, 256>}, {pipeline_mode = #tpu.pipeline_mode<synchronous>, transform_indices = @transform_1, window_bounds = array<i64: 256, 128>}, {pipeline_mode = #tpu.pipeline_mode<synchronous>, transform_indices = @transform_2, window_bounds = array<i64: 1, 128>}, {pipeline_mode = #tpu.pipeline_mode<synchronous>, transform_indices = @transform_3, window_bounds = array<i64: 128, 128>}, {pipeline_mode = #tpu.pipeline_mode<synchronous>, transform_indices = @transform_4, window_bounds = array<i64: 1, 128>}, {pipeline_mode = #tpu.pipeline_mode<synchronous>, transform_indices = @transform_5, window_bounds = array<i64: 128, 128>}, {pipeline_mode = #tpu.pipeline_mode<synchronous>, transform_indices = @transform_6, window_bounds = array<i64: 1, 128>}, {pipeline_mode = #tpu.pipeline_mode<synchronous>, transform_indices = @transform_7, window_bounds = array<i64: 128, 128>}, {pipeline_mode = #tpu.pipeline_mode<synchronous>, transform_indices = @transform_8, window_bounds = array<i64: 1, 128>}, {transform_indices = @transform_9, window_bounds = array<i64: 128, 128>}]} {
    %c0 = arith.constant 0 : index
    %c0_0 = arith.constant 0 : index
    %0 = vector.load %arg1[%c0, %c0_0] : memref<128x256xf32, #tpu.memory_space<vmem>>, vector<128x256xf32>
    %1 = arith.truncf %0 : vector<128x256xf32> to vector<128x256xbf16>
    %c0_1 = arith.constant 0 : index
    %c0_2 = arith.constant 0 : index
    %2 = vector.load %arg2[%c0_1, %c0_2] : memref<256x128xbf16, #tpu.memory_space<vmem>>, vector<256x128xbf16>
    %c0_3 = arith.constant 0 : index
    %c0_4 = arith.constant 0 : index
    %3 = vector.load %arg3[%c0_3, %c0_4] : memref<1x128xf32, #tpu.memory_space<vmem>>, vector<1x128xf32>
    %cst = arith.constant dense<0.000000e+00> : vector<128x128xf32>
    %4 = tpu.matmul %1, %2, %cst {dimension_numbers = #tpu.dot_dimension_numbers<[1], [0], [0], [1], [0, 0, 1, 1], [], []>} : vector<128x256xbf16>, vector<256x128xbf16>, vector<128x128xf32> -> vector<128x128xf32>
    %5 = vector.broadcast %3 : vector<1x128xf32> to vector<128x128xf32>
    %6 = arith.addf %4, %5 : vector<128x128xf32>
    %cst_5 = arith.constant 0.000000e+00 : f32
    %7 = vector.broadcast %cst_5 : f32 to vector<128x128xf32>
    %8 = arith.maximumf %6, %7 : vector<128x128xf32>
    %9 = arith.truncf %8 : vector<128x128xf32> to vector<128x128xbf16>
    %c0_6 = arith.constant 0 : index
    %c0_7 = arith.constant 0 : index
    %10 = vector.load %arg4[%c0_6, %c0_7] : memref<128x128xbf16, #tpu.memory_space<vmem>>, vector<128x128xbf16>
    %c0_8 = arith.constant 0 : index
    %c0_9 = arith.constant 0 : index
    %11 = vector.load %arg5[%c0_8, %c0_9] : memref<1x128xf32, #tpu.memory_space<vmem>>, vector<1x128xf32>
    %cst_10 = arith.constant dense<0.000000e+00> : vector<128x128xf32>
    %12 = tpu.matmul %9, %10, %cst_10 {dimension_numbers = #tpu.dot_dimension_numbers<[1], [0], [0], [1], [0, 0, 1, 1], [], []>} : vector<128x128xbf16>, vector<128x128xbf16>, vector<128x128xf32> -> vector<128x128xf32>
    %13 = vector.broadcast %11 : vector<1x128xf32> to vector<128x128xf32>
    %14 = arith.addf %12, %13 : vector<128x128xf32>
    %cst_11 = arith.constant 0.000000e+00 : f32
    %15 = vector.broadcast %cst_11 : f32 to vector<128x128xf32>
    %16 = arith.maximumf %14, %15 : vector<128x128xf32>
    %17 = arith.truncf %16 : vector<128x128xf32> to vector<128x128xbf16>
    %c0_12 = arith.constant 0 : index
    %c0_13 = arith.constant 0 : index
    %18 = vector.load %arg6[%c0_12, %c0_13] : memref<128x128xbf16, #tpu.memory_space<vmem>>, vector<128x128xbf16>
    %c0_14 = arith.constant 0 : index
    %c0_15 = arith.constant 0 : index
    %19 = vector.load %arg7[%c0_14, %c0_15] : memref<1x128xf32, #tpu.memory_space<vmem>>, vector<1x128xf32>
    %cst_16 = arith.constant dense<0.000000e+00> : vector<128x128xf32>
    %20 = tpu.matmul %17, %18, %cst_16 {dimension_numbers = #tpu.dot_dimension_numbers<[1], [0], [0], [1], [0, 0, 1, 1], [], []>} : vector<128x128xbf16>, vector<128x128xbf16>, vector<128x128xf32> -> vector<128x128xf32>
    %21 = vector.broadcast %19 : vector<1x128xf32> to vector<128x128xf32>
    %22 = arith.addf %20, %21 : vector<128x128xf32>
    %cst_17 = arith.constant 0.000000e+00 : f32
    %23 = vector.broadcast %cst_17 : f32 to vector<128x128xf32>
    %24 = arith.maximumf %22, %23 : vector<128x128xf32>
    %25 = arith.truncf %24 : vector<128x128xf32> to vector<128x128xbf16>
    %c0_18 = arith.constant 0 : index
    %c0_19 = arith.constant 0 : index
    %26 = vector.load %arg8[%c0_18, %c0_19] : memref<128x128xbf16, #tpu.memory_space<vmem>>, vector<128x128xbf16>
    %c0_20 = arith.constant 0 : index
    %c0_21 = arith.constant 0 : index
    %27 = vector.load %arg9[%c0_20, %c0_21] : memref<1x128xf32, #tpu.memory_space<vmem>>, vector<1x128xf32>
    %cst_22 = arith.constant dense<0.000000e+00> : vector<128x128xf32>
    %28 = tpu.matmul %25, %26, %cst_22 {dimension_numbers = #tpu.dot_dimension_numbers<[1], [0], [0], [1], [0, 0, 1, 1], [], []>} : vector<128x128xbf16>, vector<128x128xbf16>, vector<128x128xf32> -> vector<128x128xf32>
    %29 = vector.broadcast %27 : vector<1x128xf32> to vector<128x128xf32>
    %30 = arith.addf %28, %29 : vector<128x128xf32>
    %cst_23 = arith.constant dense<0xFF800000> : vector<128xf32>
    %31 = vector.multi_reduction <maximumf>, %30, %cst_23 [1] : vector<128x128xf32> to vector<128xf32>
    %32 = vector.shape_cast %31 : vector<128xf32> to vector<128x1xf32>
    %33 = vector.broadcast %32 : vector<128x1xf32> to vector<128x128xf32>
    %34 = arith.subf %30, %33 : vector<128x128xf32>
    %35 = math.exp %34 : vector<128x128xf32>
    %cst_24 = arith.constant dense<0.000000e+00> : vector<128xf32>
    %36 = vector.multi_reduction <add>, %35, %cst_24 [1] : vector<128x128xf32> to vector<128xf32>
    %37 = vector.shape_cast %36 : vector<128xf32> to vector<128x1xf32>
    %38 = math.log %37 : vector<128x1xf32>
    %39 = vector.broadcast %38 : vector<128x1xf32> to vector<128x128xf32>
    %40 = arith.subf %34, %39 : vector<128x128xf32>
    %c0_25 = arith.constant 0 : index
    %c0_26 = arith.constant 0 : index
    %41 = vector.load %arg10[%c0_25, %c0_26] : memref<128x128xf32, #tpu.memory_space<vmem>>, vector<128x128xf32>
    tpu.vector_store %arg10[%c0_25, %c0_26], %40 {strides = array<i32>} : memref<128x128xf32, #tpu.memory_space<vmem>>, vector<128x128xf32>,
    return
  }
  func.func @transform_0(%arg0: i32) -> (i32, i32) {
    %c0_i32 = arith.constant 0 : i32
    %c0_i32_0 = arith.constant 0 : i32
    return %arg0, %c0_i32 : i32, i32
  }
  func.func @transform_1(%arg0: i32) -> (i32, i32) {
    %c0_i32 = arith.constant 0 : i32
    %c0_i32_0 = arith.constant 0 : i32
    %c0_i32_1 = arith.constant 0 : i32
    return %c0_i32, %c0_i32_0 : i32, i32
  }
  func.func @transform_2(%arg0: i32) -> (i32, i32) {
    %c0_i32 = arith.constant 0 : i32
    %c0_i32_0 = arith.constant 0 : i32
    %c0_i32_1 = arith.constant 0 : i32
    return %c0_i32, %c0_i32_0 : i32, i32
  }
  func.func @transform_3(%arg0: i32) -> (i32, i32) {
    %c0_i32 = arith.constant 0 : i32
    %c0_i32_0 = arith.constant 0 : i32
    %c0_i32_1 = arith.constant 0 : i32
    return %c0_i32, %c0_i32_0 : i32, i32
  }
  func.func @transform_4(%arg0: i32) -> (i32, i32) {
    %c0_i32 = arith.constant 0 : i32
    %c0_i32_0 = arith.constant 0 : i32
    %c0_i32_1 = arith.constant 0 : i32
    return %c0_i32, %c0_i32_0 : i32, i32
  }
  func.func @transform_5(%arg0: i32) -> (i32, i32) {
    %c0_i32 = arith.constant 0 : i32
    %c0_i32_0 = arith.constant 0 : i32
    %c0_i32_1 = arith.constant 0 : i32
    return %c0_i32, %c0_i32_0 : i32, i32
  }
  func.func @transform_6(%arg0: i32) -> (i32, i32) {
    %c0_i32 = arith.constant 0 : i32
    %c0_i32_0 = arith.constant 0 : i32
    %c0_i32_1 = arith.constant 0 : i32
    return %c0_i32, %c0_i32_0 : i32, i32
  }
  func.func @transform_7(%arg0: i32) -> (i32, i32) {
    %c0_i32 = arith.constant 0 : i32
    %c0_i32_0 = arith.constant 0 : i32
    %c0_i32_1 = arith.constant 0 : i32
    return %c0_i32, %c0_i32_0 : i32, i32
  }
  func.func @transform_8(%arg0: i32) -> (i32, i32) {
    %c0_i32 = arith.constant 0 : i32
    %c0_i32_0 = arith.constant 0 : i32
    %c0_i32_1 = arith.constant 0 : i32
    return %c0_i32, %c0_i32_0 : i32, i32
  }
  func.func @transform_9(%arg0: i32) -> (i32, i32) {
    %c0_i32 = arith.constant 0 : i32
    %c0_i32_0 = arith.constant 0 : i32
    return %arg0, %c0_i32 : i32, i32
  }
}

</mosaic_0001>

<llo_original>
// kernel: tpu_custom_call.1
$region0: #{tpu_custom_call.1}
  #allocation0 [shape = 'u32[]', space=smem, size = 0x4, offset = 0x4, fixed_abs, tag = 'smem constant byte address 0x4 - core index']
  #allocation1 [shape = 'u32[72,128]{1,0:T(1,128)}', space=vmem, size = 0x9000, scoped, tag = 'internal scratch']
  %s0 = inlined_call_operand.hbm [shape: f32[256,256], index: 0, kind: input, shape index: {}]
  %s1 = inlined_call_operand.hbm [shape: bf16[256,128], index: 1, kind: input, shape index: {}]
  %s2 = inlined_call_operand.vmem [shape: f32[1,128], index: 2, kind: input, shape index: {}]
  %s3 = inlined_call_operand.hbm [shape: bf16[128,128], index: 3, kind: input, shape index: {}]
  %s4 = inlined_call_operand.vmem [shape: f32[1,128], index: 4, kind: input, shape index: {}]
  %s5 = inlined_call_operand.hbm [shape: bf16[128,128], index: 5, kind: input, shape index: {}]
  %s6 = inlined_call_operand.vmem [shape: f32[1,128], index: 6, kind: input, shape index: {}]
  %s7 = inlined_call_operand.hbm [shape: bf16[128,128], index: 7, kind: input, shape index: {}]
  %s8 = inlined_call_operand.vmem [shape: f32[1,128], index: 8, kind: input, shape index: {}]
  %s9 = inlined_call_operand.hbm [shape: f32[256,128], index: 9, kind: output, shape index: {}]
  %s10 = sld [smem:[#allocation0]]
  $region89: #{tpu_custom_call.1} parent=0
    _
  %s12 = ssub.s32 1, %s10
  %s13 = scalar_select 0, %s12, %s10
  $region1: #{tpu_custom_call.1} parent=0
    #allocation2 [shape = 'u8[262144]{0}', space=vmem, size = 0x40000, scoped, tag = 'input window, operand 0']
    #allocation3 [shape = 's32[2]{0}', space=sflag, size = 0x8, scoped, tag = 'scoped memory for tpu_custom_call.1']
    #allocation4 [shape = 's32[2]{0}', space=sflag, size = 0x8, scoped, tag = 'scoped memory for tpu_custom_call.1']
    #allocation5 [shape = 'u8[65536]{0}', space=vmem, size = 0x10000, scoped, tag = 'input window, operand 1, single buffered']
    #allocation6 [shape = 's32[1]{0}', space=sflag, size = 0x4, scoped, tag = 'scoped memory for tpu_custom_call.1']
    #allocation7 [shape = 'u8[32768]{0}', space=vmem, size = 0x8000, scoped, tag = 'input window, operand 3, single buffered']
    #allocation8 [shape = 'u8[32768]{0}', space=vmem, size = 0x8000, scoped, tag = 'input window, operand 5, single buffered']
    #allocation9 [shape = 's32[1]{0}', space=sflag, size = 0x4, scoped, tag = 'scoped memory for tpu_custom_call.1']
    #allocation10 [shape = 'u8[32768]{0}', space=vmem, size = 0x8000, scoped, tag = 'input window, operand 7, single buffered']
    #allocation11 [shape = 'u8[131072]{0}', space=vmem, size = 0x20000, scoped, tag = 'output window, operand 0']
    %14 = vsyncpa [#allocation3], 0
    %s15 = scalar_lea.sflag [#allocation3], 1
    %16 = vsyncpa %s15, 0
    %17 = vsyncpa [#allocation6], 0
    %18 = vsyncpa [#allocation9], 0
    %19 = vsyncpa [#allocation4], 0
    %s20 = scalar_lea.sflag [#allocation4], 1
    %21 = vsyncpa %s20, 0
    loop: start=0, step=1, limit=4
    $region2: #{tpu_custom_call.1} parent=1 // loop_pre_header
      _
    $region3: #{tpu_custom_call.1} parent=1 // loop_header
      %s23 = sphi 0, %s27
      %p24 = scmp.ge.s32.totalorder %s23, 4
      %s33 = sphi 0, %s35
      %s36 = sphi 0, %s33
      %s37 = sphi 0, %s36
      %s53 = sphi 0, %s37
      %s57 = sphi 0, %s57
      %s59 = sphi 0, %s57
      %s60 = sphi 0, %s59
      %s74 = sphi 0, %s60
      %s78 = sphi 0, %s78
      %s80 = sphi 0, %s78
      %s81 = sphi 0, %s80
      %s95 = sphi 0, %s81
      %s99 = sphi 0, %s99
      %s101 = sphi 0, %s99
      %s102 = sphi 0, %s101
      %s116 = sphi 0, %s102
      %s120 = sphi 0, %s120
      %s122 = sphi 0, %s120
      %s123 = sphi 0, %s122
      %s137 = sphi 0, %s123
      %s141 = sphi 0, %s141
      %s143 = sphi 0, %s141
      %s144 = sphi 0, %s143
      %s158 = sphi 0, %s144
      %s162 = sphi 0, %s162
      %s164 = sphi 0, %s162
      %s165 = sphi 0, %s164
      %s179 = sphi 0, %s165
      %s183 = sphi 0, %s183
      %s185 = sphi 0, %s183
      %s186 = sphi 0, %s185
      %s200 = sphi 0, %s186
      %s204 = sphi 0, %s204
      %s206 = sphi 0, %s204
      %s207 = sphi 0, %s206
      %s221 = sphi 0, %s207
      %s227 = sphi 0, %s229
      %s230 = sphi 0, %s227
      %s231 = sphi 0, %s230
      %s247 = sphi 0, %s231
    $region4: #{tpu_custom_call.1} parent=1 // loop_header_branch
      %26 = sbr.rel (%p24) target = $region8
    $region5: #{tpu_custom_call.1} parent=1 // loop_body
      %s28 = ssub.s32 %s23, 1
      %s29 = ssub.s32 %s23, 2
      %s30 = sadd.s32 %s23, 1
      %s31 = ssub.s32 %s23, %s30
      %p32 = scmp.eq.s32.totalorder %s31, 0
      %s34 = sadd.s32 %s33, 1
      %s35 = scalar_select %p32, %s33, %s34
      %p38 = pneg %p32
      %p39 = scmp.eq.s32.totalorder %s23, 1
      %p40 = por %p38, %p39
      %p41 = scmp.ne.s32.totalorder %s33, %s36
      %p42 = scmp.eq.s32.totalorder %s23, 0
      %p43 = por %p41, %p42
      %p44 = scmp.ne.s32.totalorder %s33, %s36
      %p45 = scmp.eq.s32.totalorder %s28, 1
      %p46 = por %p44, %p45
      %p47 = scmp.ne.s32.totalorder %s36, %s37
      %p48 = scmp.eq.s32.totalorder %s28, 0
      %p49 = por %p47, %p48
      %p50 = scmp.ne.s32.totalorder %s36, %s37
      %p51 = scmp.eq.s32.totalorder %s29, 1
      %p52 = por %p50, %p51
      %p54 = scmp.ne.s32.totalorder %s37, %s53
      %p55 = scmp.eq.s32.totalorder %s29, 0
      %p56 = por %p54, %p55
      %s58 = sadd.s32 %s57, 1
      %p61 = scmp.eq.s32.totalorder %s23, 1
      %p62 = scmp.ne.s32.totalorder %s57, %s59
      %p63 = scmp.eq.s32.totalorder %s23, 0
      %p64 = por %p62, %p63
      %p65 = scmp.ne.s32.totalorder %s57, %s59
      %p66 = scmp.eq.s32.totalorder %s28, 1
      %p67 = por %p65, %p66
      %p68 = scmp.ne.s32.totalorder %s59, %s60
      %p69 = scmp.eq.s32.totalorder %s28, 0
      %p70 = por %p68, %p69
      %p71 = scmp.ne.s32.totalorder %s59, %s60
      %p72 = scmp.eq.s32.totalorder %s29, 1
      %p73 = por %p71, %p72
      %p75 = scmp.ne.s32.totalorder %s60, %s74
      %p76 = scmp.eq.s32.totalorder %s29, 0
      %p77 = por %p75, %p76
      %s79 = sadd.s32 %s78, 1
      %p82 = scmp.eq.s32.totalorder %s23, 1
      %p83 = scmp.ne.s32.totalorder %s78, %s80
      %p84 = scmp.eq.s32.totalorder %s23, 0
      %p85 = por %p83, %p84
      %p86 = scmp.ne.s32.totalorder %s78, %s80
      %p87 = scmp.eq.s32.totalorder %s28, 1
      %p88 = por %p86, %p87
      %p89 = scmp.ne.s32.totalorder %s80, %s81
      %p90 = scmp.eq.s32.totalorder %s28, 0
      %p91 = por %p89, %p90
      %p92 = scmp.ne.s32.totalorder %s80, %s81
      %p93 = scmp.eq.s32.totalorder %s29, 1
      %p94 = por %p92, %p93
      %p96 = scmp.ne.s32.totalorder %s81, %s95
      %p97 = scmp.eq.s32.totalorder %s29, 0
      %p98 = por %p96, %p97
      %s100 = sadd.s32 %s99, 1
      %p103 = scmp.eq.s32.totalorder %s23, 1
      %p104 = scmp.ne.s32.totalorder %s99, %s101
      %p105 = scmp.eq.s32.totalorder %s23, 0
      %p106 = por %p104, %p105
      %p107 = scmp.ne.s32.totalorder %s99, %s101
      %p108 = scmp.eq.s32.totalorder %s28, 1
      %p109 = por %p107, %p108
      %p110 = scmp.ne.s32.totalorder %s101, %s102
      %p111 = scmp.eq.s32.totalorder %s28, 0
      %p112 = por %p110, %p111
      %p113 = scmp.ne.s32.totalorder %s101, %s102
      %p114 = scmp.eq.s32.totalorder %s29, 1
      %p115 = por %p113, %p114
      %p117 = scmp.ne.s32.totalorder %s102, %s116
      %p118 = scmp.eq.s32.totalorder %s29, 0
      %p119 = por %p117, %p118
      %s121 = sadd.s32 %s120, 1
      %p124 = scmp.eq.s32.totalorder %s23, 1
      %p125 = scmp.ne.s32.totalorder %s120, %s122
      %p126 = scmp.eq.s32.totalorder %s23, 0
      %p127 = por %p125, %p126
      %p128 = scmp.ne.s32.totalorder %s120, %s122
      %p129 = scmp.eq.s32.totalorder %s28, 1
      %p130 = por %p128, %p129
      %p131 = scmp.ne.s32.totalorder %s122, %s123
      %p132 = scmp.eq.s32.totalorder %s28, 0
      %p133 = por %p131, %p132
      %p134 = scmp.ne.s32.totalorder %s122, %s123
      %p135 = scmp.eq.s32.totalorder %s29, 1
      %p136 = por %p134, %p135
      %p138 = scmp.ne.s32.totalorder %s123, %s137
      %p139 = scmp.eq.s32.totalorder %s29, 0
      %p140 = por %p138, %p139
      %s142 = sadd.s32 %s141, 1
      %p145 = scmp.eq.s32.totalorder %s23, 1
      %p146 = scmp.ne.s32.totalorder %s141, %s143
      %p147 = scmp.eq.s32.totalorder %s23, 0
      %p148 = por %p146, %p147
      %p149 = scmp.ne.s32.totalorder %s141, %s143
      %p150 = scmp.eq.s32.totalorder %s28, 1
      %p151 = por %p149, %p150
      %p152 = scmp.ne.s32.totalorder %s143, %s144
      %p153 = scmp.eq.s32.totalorder %s28, 0
      %p154 = por %p152, %p153
      %p155 = scmp.ne.s32.totalorder %s143, %s144
      %p156 = scmp.eq.s32.totalorder %s29, 1
      %p157 = por %p155, %p156
      %p159 = scmp.ne.s32.totalorder %s144, %s158
      %p160 = scmp.eq.s32.totalorder %s29, 0
      %p161 = por %p159, %p160
      %s163 = sadd.s32 %s162, 1
      %p166 = scmp.eq.s32.totalorder %s23, 1
      %p167 = scmp.ne.s32.totalorder %s162, %s164
      %p168 = scmp.eq.s32.totalorder %s23, 0
      %p169 = por %p167, %p168
      %p170 = scmp.ne.s32.totalorder %s162, %s164
      %p171 = scmp.eq.s32.totalorder %s28, 1
      %p172 = por %p170, %p171
      %p173 = scmp.ne.s32.totalorder %s164, %s165
      %p174 = scmp.eq.s32.totalorder %s28, 0
      %p175 = por %p173, %p174
      %p176 = scmp.ne.s32.totalorder %s164, %s165
      %p177 = scmp.eq.s32.totalorder %s29, 1
      %p178 = por %p176, %p177
      %p180 = scmp.ne.s32.totalorder %s165, %s179
      %p181 = scmp.eq.s32.totalorder %s29, 0
      %p182 = por %p180, %p181
      %s184 = sadd.s32 %s183, 1
      %p187 = scmp.eq.s32.totalorder %s23, 1
      %p188 = scmp.ne.s32.totalorder %s183, %s185
      %p189 = scmp.eq.s32.totalorder %s23, 0
      %p190 = por %p188, %p189
      %p191 = scmp.ne.s32.totalorder %s183, %s185
      %p192 = scmp.eq.s32.totalorder %s28, 1
      %p193 = por %p191, %p192
      %p194 = scmp.ne.s32.totalorder %s185, %s186
      %p195 = scmp.eq.s32.totalorder %s28, 0
      %p196 = por %p194, %p195
      %p197 = scmp.ne.s32.totalorder %s185, %s186
      %p198 = scmp.eq.s32.totalorder %s29, 1
      %p199 = por %p197, %p198
      %p201 = scmp.ne.s32.totalorder %s186, %s200
      %p202 = scmp.eq.s32.totalorder %s29, 0
      %p203 = por %p201, %p202
      %s205 = sadd.s32 %s204, 1
      %p208 = scmp.eq.s32.totalorder %s23, 1
      %p209 = scmp.ne.s32.totalorder %s204, %s206
      %p210 = scmp.eq.s32.totalorder %s23, 0
      %p211 = por %p209, %p210
      %p212 = scmp.ne.s32.totalorder %s204, %s206
      %p213 = scmp.eq.s32.totalorder %s28, 1
      %p214 = por %p212, %p213
      %p215 = scmp.ne.s32.totalorder %s206, %s207
      %p216 = scmp.eq.s32.totalorder %s28, 0
      %p217 = por %p215, %p216
      %p218 = scmp.ne.s32.totalorder %s206, %s207
      %p219 = scmp.eq.s32.totalorder %s29, 1
      %p220 = por %p218, %p219
      %p222 = scmp.ne.s32.totalorder %s207, %s221
      %p223 = scmp.eq.s32.totalorder %s29, 0
      %p224 = por %p222, %p223
      %s225 = ssub.s32 %s23, %s30
      %p226 = scmp.eq.s32.totalorder %s225, 0
      %s228 = sadd.s32 %s227, 1
      %s229 = scalar_select %p226, %s227, %s228
      %p232 = pneg %p226
      %p233 = scmp.eq.s32.totalorder %s23, 1
      %p234 = por %p232, %p233
      %p235 = scmp.ne.s32.totalorder %s227, %s230
      %p236 = scmp.eq.s32.totalorder %s23, 0
      %p237 = por %p235, %p236
      %p238 = scmp.ne.s32.totalorder %s227, %s230
      %p239 = scmp.eq.s32.totalorder %s28, 1
      %p240 = por %p238, %p239
      %p241 = scmp.ne.s32.totalorder %s230, %s231
      %p242 = scmp.eq.s32.totalorder %s28, 0
      %p243 = por %p241, %p242
      %p244 = scmp.ne.s32.totalorder %s230, %s231
      %p245 = scmp.eq.s32.totalorder %s29, 1
      %p246 = por %p244, %p245
      %p248 = scmp.ne.s32.totalorder %s231, %s247
      %p249 = scmp.eq.s32.totalorder %s29, 0
      %p250 = por %p248, %p249
      %p251 = scmp.le.s32.totalorder 1, %s23
      %p252 = scmp.lt.s32.totalorder %s23, 3
      %p253 = pnand %p251, %p252
      %p254 = pneg %p253
      // Predicated region
      $region9: #{tpu_custom_call.1} parent=5 // pred_check
        _
      $region10: #{tpu_custom_call.1} parent=5 // pred_check_branch
        %256 = sbr.rel (%p253) target = $region12
      $region11: #{tpu_custom_call.1} parent=5 // pred_region
        %s257 = ssub.s32 %s23, 1
        // Predicated region
        $region13: #{tpu_custom_call.1} parent=11 // pred_check
          %p258 = pneg %p70
        $region14: #{tpu_custom_call.1} parent=11 // pred_check_branch
          %260 = sbr.rel (%p258) target = $region16
        $region15: #{tpu_custom_call.1} parent=11 // pred_region
          %262 = vsyncadd [#allocation6], 0
          %s263 = sshll.u32 %s1, 4
          %s264 = int_to_ptr.hbm [resolvable:$true] %s263
          %s265 = sshll.u32 [#allocation5], 4
          %s266 = int_to_ptr.vmem [resolvable:$true] %s265
          %271 = dma.hbm_to_vmem [thread:$0]  %s264, 2048, %s266, [#allocation6], 64, 64, 4
        $region16: #{tpu_custom_call.1} parent=11 // pred_fallthru
          _
        // Predicated region
        $region17: #{tpu_custom_call.1} parent=11 // pred_check
          %p272 = pneg %p91
        $region18: #{tpu_custom_call.1} parent=11 // pred_check_branch
          %274 = sbr.rel (%p272) target = $region20
        $region19: #{tpu_custom_call.1} parent=11 // pred_region
          _
        $region20: #{tpu_custom_call.1} parent=11 // pred_fallthru
          _
        // Predicated region
        $region21: #{tpu_custom_call.1} parent=11 // pred_check
          %p275 = pneg %p112
        $region22: #{tpu_custom_call.1} parent=11 // pred_check_branch
          %277 = sbr.rel (%p275) target = $region24
        $region23: #{tpu_custom_call.1} parent=11 // pred_region
          %279 = vsyncadd [#allocation6], 0
          %s280 = sshll.u32 %s3, 4
          %s281 = int_to_ptr.hbm [resolvable:$true] %s280
          %s282 = sshll.u32 [#allocation7], 4
          %s283 = int_to_ptr.vmem [resolvable:$true] %s282
          %288 = dma.hbm_to_vmem [thread:$0]  %s281, 1024, %s283, [#allocation6], 64, 64, 4
        $region24: #{tpu_custom_call.1} parent=11 // pred_fallthru
          _
        // Predicated region
        $region25: #{tpu_custom_call.1} parent=11 // pred_check
          %p289 = pneg %p133
        $region26: #{tpu_custom_call.1} parent=11 // pred_check_branch
          %291 = sbr.rel (%p289) target = $region28
        $region27: #{tpu_custom_call.1} parent=11 // pred_region
          _
        $region28: #{tpu_custom_call.1} parent=11 // pred_fallthru
          _
        // Predicated region
        $region29: #{tpu_custom_call.1} parent=11 // pred_check
          %p292 = pneg %p154
        $region30: #{tpu_custom_call.1} parent=11 // pred_check_branch
          %294 = sbr.rel (%p292) target = $region32
        $region31: #{tpu_custom_call.1} parent=11 // pred_region
          %296 = vsyncadd [#allocation9], 0
          %s297 = sshll.u32 %s5, 4
          %s298 = int_to_ptr.hbm [resolvable:$true] %s297
          %s299 = sshll.u32 [#allocation8], 4
          %s300 = int_to_ptr.vmem [resolvable:$true] %s299
          %305 = dma.hbm_to_vmem [thread:$0]  %s298, 1024, %s300, [#allocation9], 64, 64, 4
        $region32: #{tpu_custom_call.1} parent=11 // pred_fallthru
          _
        // Predicated region
        $region33: #{tpu_custom_call.1} parent=11 // pred_check
          %p306 = pneg %p175
        $region34: #{tpu_custom_call.1} parent=11 // pred_check_branch
          %308 = sbr.rel (%p306) target = $region36
        $region35: #{tpu_custom_call.1} parent=11 // pred_region
          _
        $region36: #{tpu_custom_call.1} parent=11 // pred_fallthru
          _
        // Predicated region
        $region37: #{tpu_custom_call.1} parent=11 // pred_check
          %p309 = pneg %p196
        $region38: #{tpu_custom_call.1} parent=11 // pred_check_branch
          %311 = sbr.rel (%p309) target = $region40
        $region39: #{tpu_custom_call.1} parent=11 // pred_region
          %313 = vsyncadd [#allocation9], 0
          %s314 = sshll.u32 %s7, 4
          %s315 = int_to_ptr.hbm [resolvable:$true] %s314
          %s316 = sshll.u32 [#allocation10], 4
          %s317 = int_to_ptr.vmem [resolvable:$true] %s316
          %322 = dma.hbm_to_vmem [thread:$0]  %s315, 1024, %s317, [#allocation9], 64, 64, 4
        $region40: #{tpu_custom_call.1} parent=11 // pred_fallthru
          _
        // Predicated region
        $region41: #{tpu_custom_call.1} parent=11 // pred_check
          %p323 = pneg %p217
        $region42: #{tpu_custom_call.1} parent=11 // pred_check_branch
          %325 = sbr.rel (%p323) target = $region44
        $region43: #{tpu_custom_call.1} parent=11 // pred_region
          _
        $region44: #{tpu_custom_call.1} parent=11 // pred_fallthru
          _
      $region12: #{tpu_custom_call.1} parent=5 // pred_fallthru
        _
      %p326 = scmp.lt.s32.totalorder %s23, 2
      // Predicated region
      $region45: #{tpu_custom_call.1} parent=5 // pred_check
        %p327 = pneg %p326
      $region46: #{tpu_custom_call.1} parent=5 // pred_check_branch
        %329 = sbr.rel (%p327) target = $region48
      $region47: #{tpu_custom_call.1} parent=5 // pred_region
        // Predicated region
        $region49: #{tpu_custom_call.1} parent=47 // pred_check
          %p330 = pneg %p43
        $region50: #{tpu_custom_call.1} parent=47 // pred_check_branch
          %332 = sbr.rel (%p330) target = $region52
        $region51: #{tpu_custom_call.1} parent=47 // pred_region
          %s333 = sand.u32 %s33, 1
          %s334 = scalar_lea.sflag [#allocation3], %s333
          %s335 = sand.u32 %s33, 1
          %s336 = smul.addr %s335, 256
          %s337 = scalar_lea.vmem [#allocation2], %s336
          %s338 = smul.u32 16, %s23
          %340 = vsyncadd %s334, 0
          %s341 = smul.addr %s338, 2
          %s342 = smul.addr %s341, 8
          %s343 = scalar_lea.hbm %s0, %s342
          %s344 = sshll.u32 %s343, 4
          %s345 = int_to_ptr.hbm [resolvable:$true] %s344
          %s346 = sshll.u32 %s337, 4
          %s347 = int_to_ptr.vmem [resolvable:$true] %s346
          %352 = dma.hbm_to_vmem [thread:$0]  %s345, 4096, %s347, %s334, 256, 256, 16
        $region52: #{tpu_custom_call.1} parent=47 // pred_fallthru
          _
      $region48: #{tpu_custom_call.1} parent=5 // pred_fallthru
        _
      %p353 = scmp.le.s32.totalorder 1, %s23
      %p354 = scmp.lt.s32.totalorder %s23, 3
      %p355 = pnand %p353, %p354
      %p356 = pneg %p355
      // Predicated region
      $region53: #{tpu_custom_call.1} parent=5 // pred_check
        _
      $region54: #{tpu_custom_call.1} parent=5 // pred_check_branch
        %358 = sbr.rel (%p355) target = $region56
      $region55: #{tpu_custom_call.1} parent=5 // pred_region
        %s359 = ssub.s32 %s23, 1
        %s360 = sand.u32 %s36, 1
        %s361 = scalar_lea.sflag [#allocation3], %s360
        %s362 = sand.u32 %s36, 1
        %s363 = smul.addr %s362, 256
        %s364 = scalar_lea.vmem [#allocation2], %s363
        // Predicated region
        $region57: #{tpu_custom_call.1} parent=55 // pred_check
          %p365 = pneg %p49
        $region58: #{tpu_custom_call.1} parent=55 // pred_check_branch
          %367 = sbr.rel (%p365) target = $region60
        $region59: #{tpu_custom_call.1} parent=55 // pred_region
          %369 = dma.done %s361, 4096
        $region60: #{tpu_custom_call.1} parent=55 // pred_fallthru
          _
        // Predicated region
        $region61: #{tpu_custom_call.1} parent=55 // pred_check
          %p370 = pneg %p70
        $region62: #{tpu_custom_call.1} parent=55 // pred_check_branch
          %372 = sbr.rel (%p370) target = $region64
        $region63: #{tpu_custom_call.1} parent=55 // pred_region
          %374 = dma.done [#allocation6], 2048
        $region64: #{tpu_custom_call.1} parent=55 // pred_fallthru
          _
        // Predicated region
        $region65: #{tpu_custom_call.1} parent=55 // pred_check
          %p375 = pneg %p112
        $region66: #{tpu_custom_call.1} parent=55 // pred_check_branch
          %377 = sbr.rel (%p375) target = $region68
        $region67: #{tpu_custom_call.1} parent=55 // pred_region
          %379 = dma.done [#allocation6], 1024
        $region68: #{tpu_custom_call.1} parent=55 // pred_fallthru
          _
        // Predicated region
        $region69: #{tpu_custom_call.1} parent=55 // pred_check
          %p380 = pneg %p154
        $region70: #{tpu_custom_call.1} parent=55 // pred_check_branch
          %382 = sbr.rel (%p380) target = $region72
        $region71: #{tpu_custom_call.1} parent=55 // pred_region
          %384 = dma.done [#allocation9], 1024
        $region72: #{tpu_custom_call.1} parent=55 // pred_fallthru
          _
        // Predicated region
        $region73: #{tpu_custom_call.1} parent=55 // pred_check
          %p385 = pneg %p196
        $region74: #{tpu_custom_call.1} parent=55 // pred_check_branch
          %387 = sbr.rel (%p385) target = $region76
        $region75: #{tpu_custom_call.1} parent=55 // pred_region
          %389 = dma.done [#allocation9], 1024
        $region76: #{tpu_custom_call.1} parent=55 // pred_fallthru
          _
        %s390 = sand.u32 %s36, 1
        %s391 = scalar_lea.sflag [#allocation3], %s390
        %s392 = sand.u32 %s36, 1
        %s393 = smul.addr %s392, 256
        %s394 = scalar_lea.vmem [#allocation2], %s393
        %p395 = pneg %p49
        %p396 = pneg %p46
        %p397 = pneg %p70
        %p398 = pneg %p67
        %p399 = pneg %p91
        %p400 = pneg %p88
        %p401 = pneg %p112
        %p402 = pneg %p109
        %p403 = pneg %p133
        %p404 = pneg %p130
        %p405 = pneg %p154
        %p406 = pneg %p151
        %p407 = pneg %p175
        %p408 = pneg %p172
        %p409 = pneg %p196
        %p410 = pneg %p193
        %p411 = pneg %p217
        %p412 = pneg %p214
        %p413 = pneg %p243
        %p414 = pneg %p240
        %s415 = sand.u32 %s230, 1
        %s416 = scalar_lea.sflag [#allocation4], %s415
        %s417 = sand.u32 %s230, 1
        %s418 = smul.addr %s417, 128
        %s419 = scalar_lea.vmem [#allocation11], %s418
        %s420 = smul.u32 16, %s28
        %s421 = smul.u32 16, %s28
        %v422 = vld [vmem:[%s364] sm:$0xff]
        %v423 = vld [vmem:[%s364 + $0x8] sm:$0xff]
        %v424 = vld [vmem:[%s364 + $0x10] sm:$0xff]
        %v425 = vld [vmem:[%s364 + $0x18] sm:$0xff]
        %v426 = vld [vmem:[%s364 + $0x20] sm:$0xff]
        %v427 = vld [vmem:[%s364 + $0x28] sm:$0xff]
        %v428 = vld [vmem:[%s364 + $0x30] sm:$0xff]
        %v429 = vld [vmem:[%s364 + $0x38] sm:$0xff]
        %v430 = vld [vmem:[%s364 + $0x40] sm:$0xff]
        %v431 = vld [vmem:[%s364 + $0x48] sm:$0xff]
        %v432 = vld [vmem:[%s364 + $0x50] sm:$0xff]
        %v433 = vld [vmem:[%s364 + $0x58] sm:$0xff]
        %v434 = vld [vmem:[%s364 + $0x60] sm:$0xff]
        %v435 = vld [vmem:[%s364 + $0x68] sm:$0xff]
        %v436 = vld [vmem:[%s364 + $0x70] sm:$0xff]
        %v437 = vld [vmem:[%s364 + $0x78] sm:$0xff]
        %v438 = vld [vmem:[%s364 + $0x80] sm:$0xff]
        %v439 = vld [vmem:[%s364 + $0x88] sm:$0xff]
        %v440 = vld [vmem:[%s364 + $0x90] sm:$0xff]
        %v441 = vld [vmem:[%s364 + $0x98] sm:$0xff]
        %v442 = vld [vmem:[%s364 + $0xa0] sm:$0xff]
        %v443 = vld [vmem:[%s364 + $0xa8] sm:$0xff]
        %v444 = vld [vmem:[%s364 + $0xb0] sm:$0xff]
        %v445 = vld [vmem:[%s364 + $0xb8] sm:$0xff]
        %v446 = vld [vmem:[%s364 + $0xc0] sm:$0xff]
        %v447 = vld [vmem:[%s364 + $0xc8] sm:$0xff]
        %v448 = vld [vmem:[%s364 + $0xd0] sm:$0xff]
        %v449 = vld [vmem:[%s364 + $0xd8] sm:$0xff]
        %v450 = vld [vmem:[%s364 + $0xe0] sm:$0xff]
        %v451 = vld [vmem:[%s364 + $0xe8] sm:$0xff]
        %v452 = vld [vmem:[%s364 + $0xf0] sm:$0xff]
        %v453 = vld [vmem:[%s364 + $0xf8] sm:$0xff]
        %v454 = vpack.c.bf16 %v424, %v422
        %v455 = vpack.c.bf16 %v425, %v423
        %v456 = vpack.c.bf16 %v428, %v426
        %v457 = vpack.c.bf16 %v429, %v427
        %v458 = vpack.c.bf16 %v432, %v430
        %v459 = vpack.c.bf16 %v433, %v431
        %v460 = vpack.c.bf16 %v436, %v434
        %v461 = vpack.c.bf16 %v437, %v435
        %v462 = vpack.c.bf16 %v440, %v438
        %v463 = vpack.c.bf16 %v441, %v439
        %v464 = vpack.c.bf16 %v444, %v442
        %v465 = vpack.c.bf16 %v445, %v443
        %v466 = vpack.c.bf16 %v448, %v446
        %v467 = vpack.c.bf16 %v449, %v447
        %v468 = vpack.c.bf16 %v452, %v450
        %v469 = vpack.c.bf16 %v453, %v451
        %v470 = vld [vmem:[#allocation5] sm:$0xf]
        %v471 = vld [vmem:[#allocation5 + $0x4] sm:$0xf]
        %v472 = vld [vmem:[#allocation5 + $0x8] sm:$0xf]
        %v473 = vld [vmem:[#allocation5 + $0xc] sm:$0xf]
        %v474 = vld [vmem:[#allocation5 + $0x10] sm:$0xf]
        %v475 = vld [vmem:[#allocation5 + $0x14] sm:$0xf]
        %v476 = vld [vmem:[#allocation5 + $0x18] sm:$0xf]
        %v477 = vld [vmem:[#allocation5 + $0x1c] sm:$0xf]
        %v478 = vld [vmem:[#allocation5 + $0x20] sm:$0xf]
        %v479 = vld [vmem:[#allocation5 + $0x24] sm:$0xf]
        %v480 = vld [vmem:[#allocation5 + $0x28] sm:$0xf]
        %v481 = vld [vmem:[#allocation5 + $0x2c] sm:$0xf]
        %v482 = vld [vmem:[#allocation5 + $0x30] sm:$0xf]
        %v483 = vld [vmem:[#allocation5 + $0x34] sm:$0xf]
        %v484 = vld [vmem:[#allocation5 + $0x38] sm:$0xf]
        %v485 = vld [vmem:[#allocation5 + $0x3c] sm:$0xf]
        %v486 = vld [vmem:[#allocation5 + $0x40] sm:$0xf]
        %v487 = vld [vmem:[#allocation5 + $0x44] sm:$0xf]
        %v488 = vld [vmem:[#allocation5 + $0x48] sm:$0xf]
        %v489 = vld [vmem:[#allocation5 + $0x4c] sm:$0xf]
        %v490 = vld [vmem:[#allocation5 + $0x50] sm:$0xf]
        %v491 = vld [vmem:[#allocation5 + $0x54] sm:$0xf]
        %v492 = vld [vmem:[#allocation5 + $0x58] sm:$0xf]
        %v493 = vld [vmem:[#allocation5 + $0x5c] sm:$0xf]
        %v494 = vld [vmem:[#allocation5 + $0x60] sm:$0xf]
        %v495 = vld [vmem:[#allocation5 + $0x64] sm:$0xf]
        %v496 = vld [vmem:[#allocation5 + $0x68] sm:$0xf]
        %v497 = vld [vmem:[#allocation5 + $0x6c] sm:$0xf]
        %v498 = vld [vmem:[#allocation5 + $0x70] sm:$0xf]
        %v499 = vld [vmem:[#allocation5 + $0x74] sm:$0xf]
        %v500 = vld [vmem:[#allocation5 + $0x78] sm:$0xf]
        %v501 = vld [vmem:[#allocation5 + $0x7c] sm:$0xf]
        %v502 = vld [vmem:[%s2] sm:$0x1]
        %v504 = vperm.slane %v502, 0
        %v538 = vunpack.c.l.b16 %v470
        %v539 = vunpack.c.l.b16 %v471
        %v540 = vunpack.c.l.b16 %v472
        %v541 = vunpack.c.l.b16 %v473
        %v542 = vunpack.c.l.b16 %v474
        %v543 = vunpack.c.l.b16 %v475
        %v544 = vunpack.c.l.b16 %v476
        %v545 = vunpack.c.l.b16 %v477
        %v546 = vunpack.c.l.b16 %v478
        %v547 = vunpack.c.l.b16 %v479
        %v548 = vunpack.c.l.b16 %v480
        %v549 = vunpack.c.l.b16 %v481
        %v550 = vunpack.c.l.b16 %v482
        %v551 = vunpack.c.l.b16 %v483
        %v552 = vunpack.c.l.b16 %v484
        %v553 = vunpack.c.l.b16 %v485
        %v554 = vunpack.c.l.b16 %v486
        %v555 = vunpack.c.l.b16 %v487
        %v556 = vunpack.c.l.b16 %v488
        %v557 = vunpack.c.l.b16 %v489
        %v558 = vunpack.c.l.b16 %v490
        %v559 = vunpack.c.l.b16 %v491
        %v560 = vunpack.c.l.b16 %v492
        %v561 = vunpack.c.l.b16 %v493
        %v562 = vunpack.c.l.b16 %v494
        %v563 = vunpack.c.l.b16 %v495
        %v564 = vunpack.c.l.b16 %v496
        %v565 = vunpack.c.l.b16 %v497
        %v566 = vunpack.c.l.b16 %v498
        %v567 = vunpack.c.l.b16 %v499
        %v568 = vunpack.c.l.b16 %v500
        %v569 = vunpack.c.l.b16 %v501
        %v570 = vpack.c.b16 %v539, %v538
        %v571 = vpack.c.b16 %v541, %v540
        %v572 = vpack.c.b16 %v543, %v542
        %v573 = vpack.c.b16 %v545, %v544
        %v574 = vpack.c.b16 %v547, %v546
        %v575 = vpack.c.b16 %v549, %v548
        %v576 = vpack.c.b16 %v551, %v550
        %v577 = vpack.c.b16 %v553, %v552
        %v578 = vpack.c.b16 %v555, %v554
        %v579 = vpack.c.b16 %v557, %v556
        %v580 = vpack.c.b16 %v559, %v558
        %v581 = vpack.c.b16 %v561, %v560
        %v582 = vpack.c.b16 %v563, %v562
        %v583 = vpack.c.b16 %v565, %v564
        %v584 = vpack.c.b16 %v567, %v566
        %v585 = vpack.c.b16 %v569, %v568
        %602 = vmatpush.bf16.msra.mxu0 %v577
        %603 = vmatpush.bf16.msra.mxu0 %v576
        %604 = vmatpush.bf16.msra.mxu0 %v575
        %605 = vmatpush.bf16.msra.mxu0 %v574
        %606 = vmatpush.bf16.msra.mxu0 %v573
        %607 = vmatpush.bf16.msra.mxu0 %v572
        %608 = vmatpush.bf16.msra.mxu0 %v571
        %609 = vmatpush.bf16.msra.mxu0 %v570
        %610 = vmatmul.bf16.gmra.mxu0 %v454
        %v611 = vpop.f32.mrf.mxu0
        %v612 = vadd.f32 %v504, %v611
        %v613 = vpop.f32.mrf.mxu0
        %v614 = vadd.f32 %v504, %v613
        %615 = vmatmul.bf16.gmra.mxu0 %v456
        %v616 = vpop.f32.mrf.mxu0
        %v617 = vadd.f32 %v504, %v616
        %v618 = vpop.f32.mrf.mxu0
        %v619 = vadd.f32 %v504, %v618
        %620 = vmatmul.bf16.gmra.mxu0 %v458
        %v621 = vpop.f32.mrf.mxu0
        %v622 = vadd.f32 %v504, %v621
        %v623 = vpop.f32.mrf.mxu0
        %v624 = vadd.f32 %v504, %v623
        %625 = vmatmul.bf16.gmra.mxu0 %v460
        %v626 = vpop.f32.mrf.mxu0
        %v627 = vadd.f32 %v504, %v626
        %v628 = vpop.f32.mrf.mxu0
        %v629 = vadd.f32 %v504, %v628
        %630 = vmatmul.bf16.gmra.mxu0 %v462
        %v631 = vpop.f32.mrf.mxu0
        %v632 = vadd.f32 %v504, %v631
        %v633 = vpop.f32.mrf.mxu0
        %v634 = vadd.f32 %v504, %v633
        %635 = vmatmul.bf16.gmra.mxu0 %v464
        %v636 = vpop.f32.mrf.mxu0
        %v637 = vadd.f32 %v504, %v636
        %v638 = vpop.f32.mrf.mxu0
        %v639 = vadd.f32 %v504, %v638
        %640 = vmatmul.bf16.gmra.mxu0 %v466
        %v641 = vpop.f32.mrf.mxu0
        %v642 = vadd.f32 %v504, %v641
        %v643 = vpop.f32.mrf.mxu0
        %v644 = vadd.f32 %v504, %v643
        %645 = vmatmul.bf16.gmra.mxu0 %v468
        %v646 = vpop.f32.mrf.mxu0
        %v647 = vadd.f32 %v504, %v646
        %v648 = vpop.f32.mrf.mxu0
        %v649 = vadd.f32 %v504, %v648
        %650 = vdwg.mxu0
        %651 = vmatpush.bf16.msra.mxu0 %v585
        %652 = vmatpush.bf16.msra.mxu0 %v584
        %653 = vmatpush.bf16.msra.mxu0 %v583
        %654 = vmatpush.bf16.msra.mxu0 %v582
        %655 = vmatpush.bf16.msra.mxu0 %v581
        %656 = vmatpush.bf16.msra.mxu0 %v580
        %657 = vmatpush.bf16.msra.mxu0 %v579
        %658 = vmatpush.bf16.msra.mxu0 %v578
        %659 = vmatmul.bf16.gmra.mxu0 %v455
        %v660 = vpop.f32.mrf.mxu0
        %v661 = vadd.f32 %v612, %v660
        %v662 = vpop.f32.mrf.mxu0
        %v663 = vadd.f32 %v614, %v662
        %664 = vmatmul.bf16.gmra.mxu0 %v457
        %v665 = vpop.f32.mrf.mxu0
        %v666 = vadd.f32 %v617, %v665
        %v667 = vpop.f32.mrf.mxu0
        %v668 = vadd.f32 %v619, %v667
        %669 = vmatmul.bf16.gmra.mxu0 %v459
        %v670 = vpop.f32.mrf.mxu0
        %v671 = vadd.f32 %v622, %v670
        %v672 = vpop.f32.mrf.mxu0
        %v673 = vadd.f32 %v624, %v672
        %674 = vmatmul.bf16.gmra.mxu0 %v461
        %v675 = vpop.f32.mrf.mxu0
        %v676 = vadd.f32 %v627, %v675
        %v677 = vpop.f32.mrf.mxu0
        %v678 = vadd.f32 %v629, %v677
        %679 = vmatmul.bf16.gmra.mxu0 %v463
        %v680 = vpop.f32.mrf.mxu0
        %v681 = vadd.f32 %v632, %v680
        %v682 = vpop.f32.mrf.mxu0
        %v683 = vadd.f32 %v634, %v682
        %684 = vmatmul.bf16.gmra.mxu0 %v465
        %v685 = vpop.f32.mrf.mxu0
        %v686 = vadd.f32 %v637, %v685
        %v687 = vpop.f32.mrf.mxu0
        %v688 = vadd.f32 %v639, %v687
        %689 = vmatmul.bf16.gmra.mxu0 %v467
        %v690 = vpop.f32.mrf.mxu0
        %v691 = vadd.f32 %v642, %v690
        %v692 = vpop.f32.mrf.mxu0
        %v693 = vadd.f32 %v644, %v692
        %694 = vmatmul.bf16.gmra.mxu0 %v469
        %v695 = vpop.f32.mrf.mxu0
        %v696 = vadd.f32 %v647, %v695
        %v697 = vpop.f32.mrf.mxu0
        %v698 = vadd.f32 %v649, %v697
        %699 = vdwg.mxu0
        %v700 = vmax.f32 %v661, 0.0
        %v701 = vmax.f32 %v663, 0.0
        %v702 = vmax.f32 %v666, 0.0
        %v703 = vmax.f32 %v668, 0.0
        %v704 = vmax.f32 %v671, 0.0
        %v705 = vmax.f32 %v673, 0.0
        %v706 = vmax.f32 %v676, 0.0
        %v707 = vmax.f32 %v678, 0.0
        %v708 = vmax.f32 %v681, 0.0
        %v709 = vmax.f32 %v683, 0.0
        %v710 = vmax.f32 %v686, 0.0
        %v711 = vmax.f32 %v688, 0.0
        %v712 = vmax.f32 %v691, 0.0
        %v713 = vmax.f32 %v693, 0.0
        %v714 = vmax.f32 %v696, 0.0
        %v715 = vmax.f32 %v698, 0.0
        %v716 = vpack.c.bf16 %v701, %v700
        %v717 = vpack.c.bf16 %v703, %v702
        %v718 = vpack.c.bf16 %v705, %v704
        %v719 = vpack.c.bf16 %v707, %v706
        %v720 = vpack.c.bf16 %v709, %v708
        %v721 = vpack.c.bf16 %v711, %v710
        %v722 = vpack.c.bf16 %v713, %v712
        %v723 = vpack.c.bf16 %v715, %v714
        %v724 = vld [vmem:[#allocation7] sm:$0xf]
        %v725 = vld [vmem:[#allocation7 + $0x4] sm:$0xf]
        %v726 = vld [vmem:[#allocation7 + $0x8] sm:$0xf]
        %v727 = vld [vmem:[#allocation7 + $0xc] sm:$0xf]
        %v728 = vld [vmem:[#allocation7 + $0x10] sm:$0xf]
        %v729 = vld [vmem:[#allocation7 + $0x14] sm:$0xf]
        %v730 = vld [vmem:[#allocation7 + $0x18] sm:$0xf]
        %v731 = vld [vmem:[#allocation7 + $0x1c] sm:$0xf]
        %v732 = vld [vmem:[#allocation7 + $0x20] sm:$0xf]
        %v733 = vld [vmem:[#allocation7 + $0x24] sm:$0xf]
        %v734 = vld [vmem:[#allocation7 + $0x28] sm:$0xf]
        %v735 = vld [vmem:[#allocation7 + $0x2c] sm:$0xf]
        %v736 = vld [vmem:[#allocation7 + $0x30] sm:$0xf]
        %v737 = vld [vmem:[#allocation7 + $0x34] sm:$0xf]
        %v738 = vld [vmem:[#allocation7 + $0x38] sm:$0xf]
        %v739 = vld [vmem:[#allocation7 + $0x3c] sm:$0xf]
        %v740 = vld [vmem:[%s4] sm:$0x1]
        %v742 = vperm.slane %v740, 0
        %v760 = vunpack.c.l.b16 %v724
        %v761 = vunpack.c.l.b16 %v725
        %v762 = vunpack.c.l.b16 %v726
        %v763 = vunpack.c.l.b16 %v727
        %v764 = vunpack.c.l.b16 %v728
        %v765 = vunpack.c.l.b16 %v729
        %v766 = vunpack.c.l.b16 %v730
        %v767 = vunpack.c.l.b16 %v731
        %v768 = vunpack.c.l.b16 %v732
        %v769 = vunpack.c.l.b16 %v733
        %v770 = vunpack.c.l.b16 %v734
        %v771 = vunpack.c.l.b16 %v735
        %v772 = vunpack.c.l.b16 %v736
        %v773 = vunpack.c.l.b16 %v737
        %v774 = vunpack.c.l.b16 %v738
        %v775 = vunpack.c.l.b16 %v739
        %v776 = vpack.c.b16 %v761, %v760
        %v777 = vpack.c.b16 %v763, %v762
        %v778 = vpack.c.b16 %v765, %v764
        %v779 = vpack.c.b16 %v767, %v766
        %v780 = vpack.c.b16 %v769, %v768
        %v781 = vpack.c.b16 %v771, %v770
        %v782 = vpack.c.b16 %v773, %v772
        %v783 = vpack.c.b16 %v775, %v774
        %792 = vmatpush.bf16.msra.mxu0 %v783
        %793 = vmatpush.bf16.msra.mxu0 %v782
        %794 = vmatpush.bf16.msra.mxu0 %v781
        %795 = vmatpush.bf16.msra.mxu0 %v780
        %796 = vmatpush.bf16.msra.mxu0 %v779
        %797 = vmatpush.bf16.msra.mxu0 %v778
        %798 = vmatpush.bf16.msra.mxu0 %v777
        %799 = vmatpush.bf16.msra.mxu0 %v776
        %800 = vmatmul.bf16.gmra.mxu0 %v716
        %v801 = vpop.f32.mrf.mxu0
        %v802 = vadd.f32 %v742, %v801
        %v803 = vpop.f32.mrf.mxu0
        %v804 = vadd.f32 %v742, %v803
        %805 = vmatmul.bf16.gmra.mxu0 %v717
        %v806 = vpop.f32.mrf.mxu0
        %v807 = vadd.f32 %v742, %v806
        %v808 = vpop.f32.mrf.mxu0
        %v809 = vadd.f32 %v742, %v808
        %810 = vmatmul.bf16.gmra.mxu0 %v718
        %v811 = vpop.f32.mrf.mxu0
        %v812 = vadd.f32 %v742, %v811
        %v813 = vpop.f32.mrf.mxu0
        %v814 = vadd.f32 %v742, %v813
        %815 = vmatmul.bf16.gmra.mxu0 %v719
        %v816 = vpop.f32.mrf.mxu0
        %v817 = vadd.f32 %v742, %v816
        %v818 = vpop.f32.mrf.mxu0
        %v819 = vadd.f32 %v742, %v818
        %820 = vmatmul.bf16.gmra.mxu0 %v720
        %v821 = vpop.f32.mrf.mxu0
        %v822 = vadd.f32 %v742, %v821
        %v823 = vpop.f32.mrf.mxu0
        %v824 = vadd.f32 %v742, %v823
        %825 = vmatmul.bf16.gmra.mxu0 %v721
        %v826 = vpop.f32.mrf.mxu0
        %v827 = vadd.f32 %v742, %v826
        %v828 = vpop.f32.mrf.mxu0
        %v829 = vadd.f32 %v742, %v828
        %830 = vmatmul.bf16.gmra.mxu0 %v722
        %v831 = vpop.f32.mrf.mxu0
        %v832 = vadd.f32 %v742, %v831
        %v833 = vpop.f32.mrf.mxu0
        %v834 = vadd.f32 %v742, %v833
        %835 = vmatmul.bf16.gmra.mxu0 %v723
        %v836 = vpop.f32.mrf.mxu0
        %v837 = vadd.f32 %v742, %v836
        %v838 = vpop.f32.mrf.mxu0
        %v839 = vadd.f32 %v742, %v838
        %840 = vdwg.mxu0
        %v841 = vmax.f32 %v802, 0.0
        %v842 = vmax.f32 %v804, 0.0
        %v843 = vmax.f32 %v807, 0.0
        %v844 = vmax.f32 %v809, 0.0
        %v845 = vmax.f32 %v812, 0.0
        %v846 = vmax.f32 %v814, 0.0
        %v847 = vmax.f32 %v817, 0.0
        %v848 = vmax.f32 %v819, 0.0
        %v849 = vmax.f32 %v822, 0.0
        %v850 = vmax.f32 %v824, 0.0
        %v851 = vmax.f32 %v827, 0.0
        %v852 = vmax.f32 %v829, 0.0
        %v853 = vmax.f32 %v832, 0.0
        %v854 = vmax.f32 %v834, 0.0
        %v855 = vmax.f32 %v837, 0.0
        %v856 = vmax.f32 %v839, 0.0
        %v857 = vpack.c.bf16 %v842, %v841
        %v858 = vpack.c.bf16 %v844, %v843
        %v859 = vpack.c.bf16 %v846, %v845
        %v860 = vpack.c.bf16 %v848, %v847
        %v861 = vpack.c.bf16 %v850, %v849
        %v862 = vpack.c.bf16 %v852, %v851
        %v863 = vpack.c.bf16 %v854, %v853
        %v864 = vpack.c.bf16 %v856, %v855
        %v865 = vld [vmem:[#allocation8] sm:$0xf]
        %v866 = vld [vmem:[#allocation8 + $0x4] sm:$0xf]
        %v867 = vld [vmem:[#allocation8 + $0x8] sm:$0xf]
        %v868 = vld [vmem:[#allocation8 + $0xc] sm:$0xf]
        %v869 = vld [vmem:[#allocation8 + $0x10] sm:$0xf]
        %v870 = vld [vmem:[#allocation8 + $0x14] sm:$0xf]
        %v871 = vld [vmem:[#allocation8 + $0x18] sm:$0xf]
        %v872 = vld [vmem:[#allocation8 + $0x1c] sm:$0xf]
        %v873 = vld [vmem:[#allocation8 + $0x20] sm:$0xf]
        %v874 = vld [vmem:[#allocation8 + $0x24] sm:$0xf]
        %v875 = vld [vmem:[#allocation8 + $0x28] sm:$0xf]
        %v876 = vld [vmem:[#allocation8 + $0x2c] sm:$0xf]
        %v877 = vld [vmem:[#allocation8 + $0x30] sm:$0xf]
        %v878 = vld [vmem:[#allocation8 + $0x34] sm:$0xf]
        %v879 = vld [vmem:[#allocation8 + $0x38] sm:$0xf]
        %v880 = vld [vmem:[#allocation8 + $0x3c] sm:$0xf]
        %v881 = vld [vmem:[%s6] sm:$0x1]
        %v883 = vperm.slane %v881, 0
        %v901 = vunpack.c.l.b16 %v865
        %v902 = vunpack.c.l.b16 %v866
        %v903 = vunpack.c.l.b16 %v867
        %v904 = vunpack.c.l.b16 %v868
        %v905 = vunpack.c.l.b16 %v869
        %v906 = vunpack.c.l.b16 %v870
        %v907 = vunpack.c.l.b16 %v871
        %v908 = vunpack.c.l.b16 %v872
        %v909 = vunpack.c.l.b16 %v873
        %v910 = vunpack.c.l.b16 %v874
        %v911 = vunpack.c.l.b16 %v875
        %v912 = vunpack.c.l.b16 %v876
        %v913 = vunpack.c.l.b16 %v877
        %v914 = vunpack.c.l.b16 %v878
        %v915 = vunpack.c.l.b16 %v879
        %v916 = vunpack.c.l.b16 %v880
        %v917 = vpack.c.b16 %v902, %v901
        %v918 = vpack.c.b16 %v904, %v903
        %v919 = vpack.c.b16 %v906, %v905
        %v920 = vpack.c.b16 %v908, %v907
        %v921 = vpack.c.b16 %v910, %v909
        %v922 = vpack.c.b16 %v912, %v911
        %v923 = vpack.c.b16 %v914, %v913
        %v924 = vpack.c.b16 %v916, %v915
        %933 = vmatpush.bf16.msra.mxu0 %v924
        %934 = vmatpush.bf16.msra.mxu0 %v923
        %935 = vmatpush.bf16.msra.mxu0 %v922
        %936 = vmatpush.bf16.msra.mxu0 %v921
        %937 = vmatpush.bf16.msra.mxu0 %v920
        %938 = vmatpush.bf16.msra.mxu0 %v919
        %939 = vmatpush.bf16.msra.mxu0 %v918
        %940 = vmatpush.bf16.msra.mxu0 %v917
        %941 = vmatmul.bf16.gmra.mxu0 %v857
        %v942 = vpop.f32.mrf.mxu0
        %v943 = vadd.f32 %v883, %v942
        %v944 = vpop.f32.mrf.mxu0
        %v945 = vadd.f32 %v883, %v944
        %946 = vmatmul.bf16.gmra.mxu0 %v858
        %v947 = vpop.f32.mrf.mxu0
        %v948 = vadd.f32 %v883, %v947
        %v949 = vpop.f32.mrf.mxu0
        %v950 = vadd.f32 %v883, %v949
        %951 = vmatmul.bf16.gmra.mxu0 %v859
        %v952 = vpop.f32.mrf.mxu0
        %v953 = vadd.f32 %v883, %v952
        %v954 = vpop.f32.mrf.mxu0
        %v955 = vadd.f32 %v883, %v954
        %956 = vmatmul.bf16.gmra.mxu0 %v860
        %v957 = vpop.f32.mrf.mxu0
        %v958 = vadd.f32 %v883, %v957
        %v959 = vpop.f32.mrf.mxu0
        %v960 = vadd.f32 %v883, %v959
        %961 = vmatmul.bf16.gmra.mxu0 %v861
        %v962 = vpop.f32.mrf.mxu0
        %v963 = vadd.f32 %v883, %v962
        %v964 = vpop.f32.mrf.mxu0
        %v965 = vadd.f32 %v883, %v964
        %966 = vmatmul.bf16.gmra.mxu0 %v862
        %v967 = vpop.f32.mrf.mxu0
        %v968 = vadd.f32 %v883, %v967
        %v969 = vpop.f32.mrf.mxu0
        %v970 = vadd.f32 %v883, %v969
        %971 = vmatmul.bf16.gmra.mxu0 %v863
        %v972 = vpop.f32.mrf.mxu0
        %v973 = vadd.f32 %v883, %v972
        %v974 = vpop.f32.mrf.mxu0
        %v975 = vadd.f32 %v883, %v974
        %976 = vmatmul.bf16.gmra.mxu0 %v864
        %v977 = vpop.f32.mrf.mxu0
        %v978 = vadd.f32 %v883, %v977
        %v979 = vpop.f32.mrf.mxu0
        %v980 = vadd.f32 %v883, %v979
        %981 = vdwg.mxu0
        %v982 = vmax.f32 %v943, 0.0
        %v983 = vmax.f32 %v945, 0.0
        %v984 = vmax.f32 %v948, 0.0
        %v985 = vmax.f32 %v950, 0.0
        %v986 = vmax.f32 %v953, 0.0
        %v987 = vmax.f32 %v955, 0.0
        %v988 = vmax.f32 %v958, 0.0
        %v989 = vmax.f32 %v960, 0.0
        %v990 = vmax.f32 %v963, 0.0
        %v991 = vmax.f32 %v965, 0.0
        %v992 = vmax.f32 %v968, 0.0
        %v993 = vmax.f32 %v970, 0.0
        %v994 = vmax.f32 %v973, 0.0
        %v995 = vmax.f32 %v975, 0.0
        %v996 = vmax.f32 %v978, 0.0
        %v997 = vmax.f32 %v980, 0.0
        %v998 = vpack.c.bf16 %v983, %v982
        %v999 = vpack.c.bf16 %v985, %v984
        %v1000 = vpack.c.bf16 %v987, %v986
        %v1001 = vpack.c.bf16 %v989, %v988
        %v1002 = vpack.c.bf16 %v991, %v990
        %v1003 = vpack.c.bf16 %v993, %v992
        %v1004 = vpack.c.bf16 %v995, %v994
        %v1005 = vpack.c.bf16 %v997, %v996
        %v1006 = vld [vmem:[#allocation10] sm:$0xf]
        %v1007 = vld [vmem:[#allocation10 + $0x4] sm:$0xf]
        %v1008 = vld [vmem:[#allocation10 + $0x8] sm:$0xf]
        %v1009 = vld [vmem:[#allocation10 + $0xc] sm:$0xf]
        %v1010 = vld [vmem:[#allocation10 + $0x10] sm:$0xf]
        %v1011 = vld [vmem:[#allocation10 + $0x14] sm:$0xf]
        %v1012 = vld [vmem:[#allocation10 + $0x18] sm:$0xf]
        %v1013 = vld [vmem:[#allocation10 + $0x1c] sm:$0xf]
        %v1014 = vld [vmem:[#allocation10 + $0x20] sm:$0xf]
        %v1015 = vld [vmem:[#allocation10 + $0x24] sm:$0xf]
        %v1016 = vld [vmem:[#allocation10 + $0x28] sm:$0xf]
        %v1017 = vld [vmem:[#allocation10 + $0x2c] sm:$0xf]
        %v1018 = vld [vmem:[#allocation10 + $0x30] sm:$0xf]
        %v1019 = vld [vmem:[#allocation10 + $0x34] sm:$0xf]
        %v1020 = vld [vmem:[#allocation10 + $0x38] sm:$0xf]
        %v1021 = vld [vmem:[#allocation10 + $0x3c] sm:$0xf]
        %v1022 = vld [vmem:[%s8] sm:$0x1]
        %v1024 = vperm.slane %v1022, 0
        %v1042 = vunpack.c.l.b16 %v1006
        %v1043 = vunpack.c.l.b16 %v1007
        %v1044 = vunpack.c.l.b16 %v1008
        %v1045 = vunpack.c.l.b16 %v1009
        %v1046 = vunpack.c.l.b16 %v1010
        %v1047 = vunpack.c.l.b16 %v1011
        %v1048 = vunpack.c.l.b16 %v1012
        %v1049 = vunpack.c.l.b16 %v1013
        %v1050 = vunpack.c.l.b16 %v1014
        %v1051 = vunpack.c.l.b16 %v1015
        %v1052 = vunpack.c.l.b16 %v1016
        %v1053 = vunpack.c.l.b16 %v1017
        %v1054 = vunpack.c.l.b16 %v1018
        %v1055 = vunpack.c.l.b16 %v1019
        %v1056 = vunpack.c.l.b16 %v1020
        %v1057 = vunpack.c.l.b16 %v1021
        %v1058 = vpack.c.b16 %v1043, %v1042
        %v1059 = vpack.c.b16 %v1045, %v1044
        %v1060 = vpack.c.b16 %v1047, %v1046
        %v1061 = vpack.c.b16 %v1049, %v1048
        %v1062 = vpack.c.b16 %v1051, %v1050
        %v1063 = vpack.c.b16 %v1053, %v1052
        %v1064 = vpack.c.b16 %v1055, %v1054
        %v1065 = vpack.c.b16 %v1057, %v1056
        %1074 = vmatpush.bf16.msra.mxu0 %v1065
        %1075 = vmatpush.bf16.msra.mxu0 %v1064
        %1076 = vmatpush.bf16.msra.mxu0 %v1063
        %1077 = vmatpush.bf16.msra.mxu0 %v1062
        %1078 = vmatpush.bf16.msra.mxu0 %v1061
        %1079 = vmatpush.bf16.msra.mxu0 %v1060
        %1080 = vmatpush.bf16.msra.mxu0 %v1059
        %1081 = vmatpush.bf16.msra.mxu0 %v1058
        %1082 = vmatmul.bf16.gmra.mxu0 %v998
        %v1083 = vpop.f32.mrf.mxu0
        %v1084 = vadd.f32 %v1024, %v1083
        %v1085 = vpop.f32.mrf.mxu0
        %v1086 = vadd.f32 %v1024, %v1085
        %1087 = vmatmul.bf16.gmra.mxu0 %v999
        %v1088 = vpop.f32.mrf.mxu0
        %v1089 = vadd.f32 %v1024, %v1088
        %v1090 = vpop.f32.mrf.mxu0
        %v1091 = vadd.f32 %v1024, %v1090
        %1092 = vmatmul.bf16.gmra.mxu0 %v1000
        %v1093 = vpop.f32.mrf.mxu0
        %v1094 = vadd.f32 %v1024, %v1093
        %v1095 = vpop.f32.mrf.mxu0
        %v1096 = vadd.f32 %v1024, %v1095
        %1097 = vmatmul.bf16.gmra.mxu0 %v1001
        %v1098 = vpop.f32.mrf.mxu0
        %v1099 = vadd.f32 %v1024, %v1098
        %v1100 = vpop.f32.mrf.mxu0
        %v1101 = vadd.f32 %v1024, %v1100
        %1102 = vmatmul.bf16.gmra.mxu0 %v1002
        %v1103 = vpop.f32.mrf.mxu0
        %v1104 = vadd.f32 %v1024, %v1103
        %v1105 = vpop.f32.mrf.mxu0
        %v1106 = vadd.f32 %v1024, %v1105
        %1107 = vmatmul.bf16.gmra.mxu0 %v1003
        %v1108 = vpop.f32.mrf.mxu0
        %v1109 = vadd.f32 %v1024, %v1108
        %v1110 = vpop.f32.mrf.mxu0
        %v1111 = vadd.f32 %v1024, %v1110
        %1112 = vmatmul.bf16.gmra.mxu0 %v1004
        %v1113 = vpop.f32.mrf.mxu0
        %v1114 = vadd.f32 %v1024, %v1113
        %v1115 = vpop.f32.mrf.mxu0
        %v1116 = vadd.f32 %v1024, %v1115
        %1117 = vmatmul.bf16.gmra.mxu0 %v1005
        %v1118 = vpop.f32.mrf.mxu0
        %v1119 = vadd.f32 %v1024, %v1118
        %v1120 = vpop.f32.mrf.mxu0
        %v1121 = vadd.f32 %v1024, %v1120
        %1122 = vdwg.mxu0
        %1123 = vmax.xlane.f32.xlu0 %v1084
        %v1124 = vpop.xlane.xlu0 %1123
        %1125 = vmax.xlane.f32.xlu0 %v1086
        %v1126 = vpop.xlane.xlu0 %1125
        %1127 = vmax.xlane.f32.xlu0 %v1089
        %v1128 = vpop.xlane.xlu0 %1127
        %1129 = vmax.xlane.f32.xlu0 %v1091
        %v1130 = vpop.xlane.xlu0 %1129
        %1131 = vmax.xlane.f32.xlu0 %v1094
        %v1132 = vpop.xlane.xlu0 %1131
        %1133 = vmax.xlane.f32.xlu0 %v1096
        %v1134 = vpop.xlane.xlu0 %1133
        %1135 = vmax.xlane.f32.xlu0 %v1099
        %v1136 = vpop.xlane.xlu0 %1135
        %1137 = vmax.xlane.f32.xlu0 %v1101
        %v1138 = vpop.xlane.xlu0 %1137
        %1139 = vmax.xlane.f32.xlu0 %v1104
        %v1140 = vpop.xlane.xlu0 %1139
        %1141 = vmax.xlane.f32.xlu0 %v1106
        %v1142 = vpop.xlane.xlu0 %1141
        %1143 = vmax.xlane.f32.xlu0 %v1109
        %v1144 = vpop.xlane.xlu0 %1143
        %1145 = vmax.xlane.f32.xlu0 %v1111
        %v1146 = vpop.xlane.xlu0 %1145
        %1147 = vmax.xlane.f32.xlu0 %v1114
        %v1148 = vpop.xlane.xlu0 %1147
        %1149 = vmax.xlane.f32.xlu0 %v1116
        %v1150 = vpop.xlane.xlu0 %1149
        %1151 = vmax.xlane.f32.xlu0 %v1119
        %v1152 = vpop.xlane.xlu0 %1151
        %1153 = vmax.xlane.f32.xlu0 %v1121
        %v1154 = vpop.xlane.xlu0 %1153
        %v1155 = vsub.f32 %v1084, %v1124
        %v1156 = vsub.f32 %v1086, %v1126
        %v1157 = vsub.f32 %v1089, %v1128
        %v1158 = vsub.f32 %v1091, %v1130
        %v1159 = vsub.f32 %v1094, %v1132
        %v1160 = vsub.f32 %v1096, %v1134
        %v1161 = vsub.f32 %v1099, %v1136
        %v1162 = vsub.f32 %v1101, %v1138
        %v1163 = vsub.f32 %v1104, %v1140
        %v1164 = vsub.f32 %v1106, %v1142
        %v1165 = vsub.f32 %v1109, %v1144
        %v1166 = vsub.f32 %v1111, %v1146
        %v1167 = vsub.f32 %v1114, %v1148
        %v1168 = vsub.f32 %v1116, %v1150
        %v1169 = vsub.f32 %v1119, %v1152
        %v1170 = vsub.f32 %v1121, %v1154
        %v1171 = vmul.f32 %v1155, 1.442695
        %v1172 = vpow.pop %v1171
        %v1173 = vmul.f32 %v1156, 1.442695
        %v1174 = vpow.pop %v1173
        %v1175 = vmul.f32 %v1157, 1.442695
        %v1176 = vpow.pop %v1175
        %v1177 = vmul.f32 %v1158, 1.442695
        %v1178 = vpow.pop %v1177
        %v1179 = vmul.f32 %v1159, 1.442695
        %v1180 = vpow.pop %v1179
        %v1181 = vmul.f32 %v1160, 1.442695
        %v1182 = vpow.pop %v1181
        %v1183 = vmul.f32 %v1161, 1.442695
        %v1184 = vpow.pop %v1183
        %v1185 = vmul.f32 %v1162, 1.442695
        %v1186 = vpow.pop %v1185
        %v1187 = vmul.f32 %v1163, 1.442695
        %v1188 = vpow.pop %v1187
        %v1189 = vmul.f32 %v1164, 1.442695
        %v1190 = vpow.pop %v1189
        %v1191 = vmul.f32 %v1165, 1.442695
        %v1192 = vpow.pop %v1191
        %v1193 = vmul.f32 %v1166, 1.442695
        %v1194 = vpow.pop %v1193
        %v1195 = vmul.f32 %v1167, 1.442695
        %v1196 = vpow.pop %v1195
        %v1197 = vmul.f32 %v1168, 1.442695
        %v1198 = vpow.pop %v1197
        %v1199 = vmul.f32 %v1169, 1.442695
        %v1200 = vpow.pop %v1199
        %v1201 = vmul.f32 %v1170, 1.442695
        %v1202 = vpow.pop %v1201
        %1203 = vadd.xlane.f32.xlu0 %v1172
        %v1204 = vpop.xlane.xlu0 %1203
        %1205 = vadd.xlane.f32.xlu0 %v1174
        %v1206 = vpop.xlane.xlu0 %1205
        %1207 = vadd.xlane.f32.xlu0 %v1176
        %v1208 = vpop.xlane.xlu0 %1207
        %1209 = vadd.xlane.f32.xlu0 %v1178
        %v1210 = vpop.xlane.xlu0 %1209
        %1211 = vadd.xlane.f32.xlu0 %v1180
        %v1212 = vpop.xlane.xlu0 %1211
        %1213 = vadd.xlane.f32.xlu0 %v1182
        %v1214 = vpop.xlane.xlu0 %1213
        %1215 = vadd.xlane.f32.xlu0 %v1184
        %v1216 = vpop.xlane.xlu0 %1215
        %1217 = vadd.xlane.f32.xlu0 %v1186
        %v1218 = vpop.xlane.xlu0 %1217
        %1219 = vadd.xlane.f32.xlu0 %v1188
        %v1220 = vpop.xlane.xlu0 %1219
        %1221 = vadd.xlane.f32.xlu0 %v1190
        %v1222 = vpop.xlane.xlu0 %1221
        %1223 = vadd.xlane.f32.xlu0 %v1192
        %v1224 = vpop.xlane.xlu0 %1223
        %1225 = vadd.xlane.f32.xlu0 %v1194
        %v1226 = vpop.xlane.xlu0 %1225
        %1227 = vadd.xlane.f32.xlu0 %v1196
        %v1228 = vpop.xlane.xlu0 %1227
        %1229 = vadd.xlane.f32.xlu0 %v1198
        %v1230 = vpop.xlane.xlu0 %1229
        %1231 = vadd.xlane.f32.xlu0 %v1200
        %v1232 = vpop.xlane.xlu0 %1231
        %1233 = vadd.xlane.f32.xlu0 %v1202
        %v1234 = vpop.xlane.xlu0 %1233
        %v1235 = vlog2.pop %v1204
        %v1236 = vmul.f32 %v1235, 0.6931472
        %v1237 = vlog2.pop %v1206
        %v1238 = vmul.f32 %v1237, 0.6931472
        %v1239 = vlog2.pop %v1208
        %v1240 = vmul.f32 %v1239, 0.6931472
        %v1241 = vlog2.pop %v1210
        %v1242 = vmul.f32 %v1241, 0.6931472
        %v1243 = vlog2.pop %v1212
        %v1244 = vmul.f32 %v1243, 0.6931472
        %v1245 = vlog2.pop %v1214
        %v1246 = vmul.f32 %v1245, 0.6931472
        %v1247 = vlog2.pop %v1216
        %v1248 = vmul.f32 %v1247, 0.6931472
        %v1249 = vlog2.pop %v1218
        %v1250 = vmul.f32 %v1249, 0.6931472
        %v1251 = vlog2.pop %v1220
        %v1252 = vmul.f32 %v1251, 0.6931472
        %v1253 = vlog2.pop %v1222
        %v1254 = vmul.f32 %v1253, 0.6931472
        %v1255 = vlog2.pop %v1224
        %v1256 = vmul.f32 %v1255, 0.6931472
        %v1257 = vlog2.pop %v1226
        %v1258 = vmul.f32 %v1257, 0.6931472
        %v1259 = vlog2.pop %v1228
        %v1260 = vmul.f32 %v1259, 0.6931472
        %v1261 = vlog2.pop %v1230
        %v1262 = vmul.f32 %v1261, 0.6931472
        %v1263 = vlog2.pop %v1232
        %v1264 = vmul.f32 %v1263, 0.6931472
        %v1265 = vlog2.pop %v1234
        %v1266 = vmul.f32 %v1265, 0.6931472
        %v1267 = vsub.f32 %v1155, %v1236
        %v1268 = vsub.f32 %v1156, %v1238
        %v1269 = vsub.f32 %v1157, %v1240
        %v1270 = vsub.f32 %v1158, %v1242
        %v1271 = vsub.f32 %v1159, %v1244
        %v1272 = vsub.f32 %v1160, %v1246
        %v1273 = vsub.f32 %v1161, %v1248
        %v1274 = vsub.f32 %v1162, %v1250
        %v1275 = vsub.f32 %v1163, %v1252
        %v1276 = vsub.f32 %v1164, %v1254
        %v1277 = vsub.f32 %v1165, %v1256
        %v1278 = vsub.f32 %v1166, %v1258
        %v1279 = vsub.f32 %v1167, %v1260
        %v1280 = vsub.f32 %v1168, %v1262
        %v1281 = vsub.f32 %v1169, %v1264
        %v1282 = vsub.f32 %v1170, %v1266
        %1283 = vst [vmem:[%s419] sm:$0xff] %v1267
        %1284 = vst [vmem:[%s419 + $0x8] sm:$0xff] %v1268
        %1285 = vst [vmem:[%s419 + $0x10] sm:$0xff] %v1269
        %1286 = vst [vmem:[%s419 + $0x18] sm:$0xff] %v1270
        %1287 = vst [vmem:[%s419 + $0x20] sm:$0xff] %v1271
        %1288 = vst [vmem:[%s419 + $0x28] sm:$0xff] %v1272
        %1289 = vst [vmem:[%s419 + $0x30] sm:$0xff] %v1273
        %1290 = vst [vmem:[%s419 + $0x38] sm:$0xff] %v1274
        %1291 = vst [vmem:[%s419 + $0x40] sm:$0xff] %v1275
        %1292 = vst [vmem:[%s419 + $0x48] sm:$0xff] %v1276
        %1293 = vst [vmem:[%s419 + $0x50] sm:$0xff] %v1277
        %1294 = vst [vmem:[%s419 + $0x58] sm:$0xff] %v1278
        %1295 = vst [vmem:[%s419 + $0x60] sm:$0xff] %v1279
        %1296 = vst [vmem:[%s419 + $0x68] sm:$0xff] %v1280
        %1297 = vst [vmem:[%s419 + $0x70] sm:$0xff] %v1281
        %1298 = vst [vmem:[%s419 + $0x78] sm:$0xff] %v1282
        %s1299 = sand.u32 %s230, 1
        %s1300 = scalar_lea.sflag [#allocation4], %s1299
        %s1301 = sand.u32 %s230, 1
        %s1302 = smul.addr %s1301, 128
        %s1303 = scalar_lea.vmem [#allocation11], %s1302
        // Predicated region
        $region77: #{tpu_custom_call.1} parent=55 // pred_check
          %p1304 = pneg %p240
        $region78: #{tpu_custom_call.1} parent=55 // pred_check_branch
          %1306 = sbr.rel (%p1304) target = $region80
        $region79: #{tpu_custom_call.1} parent=55 // pred_region
          %s1307 = smul.u32 16, %s28
          %1309 = vsyncadd %s1300, 0
          %s1310 = smul.addr %s1307, 8
          %s1311 = scalar_lea.hbm %s9, %s1310
          %s1312 = sshll.u32 %s1303, 4
          %s1313 = int_to_ptr.vmem [resolvable:$true] %s1312
          %s1314 = sshll.u32 %s1311, 4
          %s1315 = int_to_ptr.hbm [resolvable:$true] %s1314
          %1320 = dma.vmem_to_hbm [thread:$0]  %s1313, 2048, %s1315, %s1300, 128, 128, 8
        $region80: #{tpu_custom_call.1} parent=55 // pred_fallthru
          _
      $region56: #{tpu_custom_call.1} parent=5 // pred_fallthru
        _
      %p1321 = scmp.le.s32.totalorder 2, %s23
      // Predicated region
      $region81: #{tpu_custom_call.1} parent=5 // pred_check
        %p1322 = pneg %p1321
      $region82: #{tpu_custom_call.1} parent=5 // pred_check_branch
        %1324 = sbr.rel (%p1322) target = $region84
      $region83: #{tpu_custom_call.1} parent=5 // pred_region
        %s1325 = ssub.s32 %s23, 2
        // Predicated region
        $region85: #{tpu_custom_call.1} parent=83 // pred_check
          %p1326 = pneg %p246
        $region86: #{tpu_custom_call.1} parent=83 // pred_check_branch
          %1328 = sbr.rel (%p1326) target = $region88
        $region87: #{tpu_custom_call.1} parent=83 // pred_region
          %s1329 = sand.u32 %s231, 1
          %s1330 = scalar_lea.sflag [#allocation4], %s1329
          %s1331 = sand.u32 %s231, 1
          %s1332 = smul.addr %s1331, 128
          %s1333 = scalar_lea.vmem [#allocation11], %s1332
          %1335 = dma.done %s1330, 2048
        $region88: #{tpu_custom_call.1} parent=83 // pred_fallthru
          _
      $region84: #{tpu_custom_call.1} parent=5 // pred_fallthru
        _
    $region6: #{tpu_custom_call.1} parent=1 // loop_footer
      %s27 = sadd.s32 1, %s23
    $region7: #{tpu_custom_call.1} parent=1 // loop_footer_branch
      %22 = sbr.rel target = $region3
    $region8: #{tpu_custom_call.1} parent=1 // loop_exit
      _
    %1336 = vsyncpa [#allocation3], 1
    %s1337 = scalar_lea.sflag [#allocation3], 1
    %1338 = vsyncpa %s1337, 1
    %1339 = vsyncpa [#allocation6], 1
    %1340 = vsyncpa [#allocation9], 1
    %1341 = vsyncpa [#allocation4], 1
    %s1342 = scalar_lea.sflag [#allocation4], 1
    %1343 = vsyncpa %s1342, 1

// kernel: tpu_custom_call.1
$region0: #{tpu_custom_call.1}
  #allocation0 [shape = 'u32[]', space=smem, size = 0x4, offset = 0x4, fixed_abs, tag = 'smem constant byte address 0x4 - core index']
  #allocation1 [shape = 'u32[72,128]{1,0:T(1,128)}', space=vmem, size = 0x9000, scoped, tag = 'internal scratch']
  %s0 = inlined_call_operand.hbm [shape: f32[256,256], index: 0, kind: input, shape index: {}]
  %s1 = inlined_call_operand.hbm [shape: bf16[256,128], index: 1, kind: input, shape index: {}]
  %s2 = inlined_call_operand.vmem [shape: f32[1,128], index: 2, kind: input, shape index: {}]
  %s3 = inlined_call_operand.hbm [shape: bf16[128,128], index: 3, kind: input, shape index: {}]
  %s4 = inlined_call_operand.vmem [shape: f32[1,128], index: 4, kind: input, shape index: {}]
  %s5 = inlined_call_operand.hbm [shape: bf16[128,128], index: 5, kind: input, shape index: {}]
  %s6 = inlined_call_operand.vmem [shape: f32[1,128], index: 6, kind: input, shape index: {}]
  %s7 = inlined_call_operand.hbm [shape: bf16[128,128], index: 7, kind: input, shape index: {}]
  %s8 = inlined_call_operand.vmem [shape: f32[1,128], index: 8, kind: input, shape index: {}]
  %s9 = inlined_call_operand.hbm [shape: f32[256,128], index: 9, kind: output, shape index: {}]
  %s10 = sld [smem:[#allocation0]]
  $region89: #{tpu_custom_call.1} parent=0
    _
  %s12 = ssub.s32 1, %s10
  %s13 = scalar_select 0, %s12, %s10
  $region1: #{tpu_custom_call.1} parent=0
    #allocation2 [shape = 'u8[262144]{0}', space=vmem, size = 0x40000, scoped, tag = 'input window, operand 0']
    #allocation3 [shape = 's32[2]{0}', space=sflag, size = 0x8, scoped, tag = 'scoped memory for tpu_custom_call.1']
    #allocation4 [shape = 's32[2]{0}', space=sflag, size = 0x8, scoped, tag = 'scoped memory for tpu_custom_call.1']
    #allocation5 [shape = 'u8[65536]{0}', space=vmem, size = 0x10000, scoped, tag = 'input window, operand 1, single buffered']
    #allocation6 [shape = 's32[1]{0}', space=sflag, size = 0x4, scoped, tag = 'scoped memory for tpu_custom_call.1']
    #allocation7 [shape = 'u8[32768]{0}', space=vmem, size = 0x8000, scoped, tag = 'input window, operand 3, single buffered']
    #allocation8 [shape = 'u8[32768]{0}', space=vmem, size = 0x8000, scoped, tag = 'input window, operand 5, single buffered']
    #allocation9 [shape = 's32[1]{0}', space=sflag, size = 0x4, scoped, tag = 'scoped memory for tpu_custom_call.1']
    #allocation10 [shape = 'u8[32768]{0}', space=vmem, size = 0x8000, scoped, tag = 'input window, operand 7, single buffered']
    #allocation11 [shape = 'u8[131072]{0}', space=vmem, size = 0x20000, scoped, tag = 'output window, operand 0']
    %14 = vsyncpa [#allocation3], 0
    %s15 = scalar_lea.sflag [#allocation3], 1
    %16 = vsyncpa %s15, 0
    %17 = vsyncpa [#allocation6], 0
    %18 = vsyncpa [#allocation9], 0
    %19 = vsyncpa [#allocation4], 0
    %s20 = scalar_lea.sflag [#allocation4], 1
    %21 = vsyncpa %s20, 0
    loop: start=0, step=1, limit=4
    $region2: #{tpu_custom_call.1} parent=1 // loop_pre_header
      _
    $region3: #{tpu_custom_call.1} parent=1 // loop_header
      %s23 = sphi 0, %s27
      %p24 = scmp.ge.s32.totalorder %s23, 4
      %s33 = sphi 0, %s35
      %s36 = sphi 0, %s33
      %s37 = sphi 0, %s36
      %s53 = sphi 0, %s37
      %s57 = sphi 0, %s57
      %s59 = sphi 0, %s57
      %s60 = sphi 0, %s59
      %s74 = sphi 0, %s60
      %s78 = sphi 0, %s78
      %s80 = sphi 0, %s78
      %s81 = sphi 0, %s80
      %s95 = sphi 0, %s81
      %s99 = sphi 0, %s99
      %s101 = sphi 0, %s99
      %s102 = sphi 0, %s101
      %s116 = sphi 0, %s102
      %s120 = sphi 0, %s120
      %s122 = sphi 0, %s120
      %s123 = sphi 0, %s122
      %s137 = sphi 0, %s123
      %s141 = sphi 0, %s141
      %s143 = sphi 0, %s141
      %s144 = sphi 0, %s143
      %s158 = sphi 0, %s144
      %s162 = sphi 0, %s162
      %s164 = sphi 0, %s162
      %s165 = sphi 0, %s164
      %s179 = sphi 0, %s165
      %s183 = sphi 0, %s183
      %s185 = sphi 0, %s183
      %s186 = sphi 0, %s185
      %s200 = sphi 0, %s186
      %s204 = sphi 0, %s204
      %s206 = sphi 0, %s204
      %s207 = sphi 0, %s206
      %s221 = sphi 0, %s207
      %s227 = sphi 0, %s229
      %s230 = sphi 0, %s227
      %s231 = sphi 0, %s230
      %s247 = sphi 0, %s231
    $region4: #{tpu_custom_call.1} parent=1 // loop_header_branch
      %26 = sbr.rel (%p24) target = $region8
    $region5: #{tpu_custom_call.1} parent=1 // loop_body
      %s28 = ssub.s32 %s23, 1
      %s29 = ssub.s32 %s23, 2
      %s30 = sadd.s32 %s23, 1
      %s31 = ssub.s32 %s23, %s30
      %p32 = scmp.eq.s32.totalorder %s31, 0
      %s34 = sadd.s32 %s33, 1
      %s35 = scalar_select %p32, %s33, %s34
      %p38 = pneg %p32
      %p39 = scmp.eq.s32.totalorder %s23, 1
      %p40 = por %p38, %p39
      %p41 = scmp.ne.s32.totalorder %s33, %s36
      %p42 = scmp.eq.s32.totalorder %s23, 0
      %p43 = por %p41, %p42
      %p44 = scmp.ne.s32.totalorder %s33, %s36
      %p45 = scmp.eq.s32.totalorder %s28, 1
      %p46 = por %p44, %p45
      %p47 = scmp.ne.s32.totalorder %s36, %s37
      %p48 = scmp.eq.s32.totalorder %s28, 0
      %p49 = por %p47, %p48
      %p50 = scmp.ne.s32.totalorder %s36, %s37
      %p51 = scmp.eq.s32.totalorder %s29, 1
      %p52 = por %p50, %p51
      %p54 = scmp.ne.s32.totalorder %s37, %s53
      %p55 = scmp.eq.s32.totalorder %s29, 0
      %p56 = por %p54, %p55
      %s58 = sadd.s32 %s57, 1
      %p61 = scmp.eq.s32.totalorder %s23, 1
      %p62 = scmp.ne.s32.totalorder %s57, %s59
      %p63 = scmp.eq.s32.totalorder %s23, 0
      %p64 = por %p62, %p63
      %p65 = scmp.ne.s32.totalorder %s57, %s59
      %p66 = scmp.eq.s32.totalorder %s28, 1
      %p67 = por %p65, %p66
      %p68 = scmp.ne.s32.totalorder %s59, %s60
      %p69 = scmp.eq.s32.totalorder %s28, 0
      %p70 = por %p68, %p69
      %p71 = scmp.ne.s32.totalorder %s59, %s60
      %p72 = scmp.eq.s32.totalorder %s29, 1
      %p73 = por %p71, %p72
      %p75 = scmp.ne.s32.totalorder %s60, %s74
      %p76 = scmp.eq.s32.totalorder %s29, 0
      %p77 = por %p75, %p76
      %s79 = sadd.s32 %s78, 1
      %p82 = scmp.eq.s32.totalorder %s23, 1
      %p83 = scmp.ne.s32.totalorder %s78, %s80
      %p84 = scmp.eq.s32.totalorder %s23, 0
      %p85 = por %p83, %p84
      %p86 = scmp.ne.s32.totalorder %s78, %s80
      %p87 = scmp.eq.s32.totalorder %s28, 1
      %p88 = por %p86, %p87
      %p89 = scmp.ne.s32.totalorder %s80, %s81
      %p90 = scmp.eq.s32.totalorder %s28, 0
      %p91 = por %p89, %p90
      %p92 = scmp.ne.s32.totalorder %s80, %s81
      %p93 = scmp.eq.s32.totalorder %s29, 1
      %p94 = por %p92, %p93
      %p96 = scmp.ne.s32.totalorder %s81, %s95
      %p97 = scmp.eq.s32.totalorder %s29, 0
      %p98 = por %p96, %p97
      %s100 = sadd.s32 %s99, 1
      %p103 = scmp.eq.s32.totalorder %s23, 1
      %p104 = scmp.ne.s32.totalorder %s99, %s101
      %p105 = scmp.eq.s32.totalorder %s23, 0
      %p106 = por %p104, %p105
      %p107 = scmp.ne.s32.totalorder %s99, %s101
      %p108 = scmp.eq.s32.totalorder %s28, 1
      %p109 = por %p107, %p108
      %p110 = scmp.ne.s32.totalorder %s101, %s102
      %p111 = scmp.eq.s32.totalorder %s28, 0
      %p112 = por %p110, %p111
      %p113 = scmp.ne.s32.totalorder %s101, %s102
      %p114 = scmp.eq.s32.totalorder %s29, 1
      %p115 = por %p113, %p114
      %p117 = scmp.ne.s32.totalorder %s102, %s116
      %p118 = scmp.eq.s32.totalorder %s29, 0
      %p119 = por %p117, %p118
      %s121 = sadd.s32 %s120, 1
      %p124 = scmp.eq.s32.totalorder %s23, 1
      %p125 = scmp.ne.s32.totalorder %s120, %s122
      %p126 = scmp.eq.s32.totalorder %s23, 0
      %p127 = por %p125, %p126
      %p128 = scmp.ne.s32.totalorder %s120, %s122
      %p129 = scmp.eq.s32.totalorder %s28, 1
      %p130 = por %p128, %p129
      %p131 = scmp.ne.s32.totalorder %s122, %s123
      %p132 = scmp.eq.s32.totalorder %s28, 0
      %p133 = por %p131, %p132
      %p134 = scmp.ne.s32.totalorder %s122, %s123
      %p135 = scmp.eq.s32.totalorder %s29, 1
      %p136 = por %p134, %p135
      %p138 = scmp.ne.s32.totalorder %s123, %s137
      %p139 = scmp.eq.s32.totalorder %s29, 0
      %p140 = por %p138, %p139
      %s142 = sadd.s32 %s141, 1
      %p145 = scmp.eq.s32.totalorder %s23, 1
      %p146 = scmp.ne.s32.totalorder %s141, %s143
      %p147 = scmp.eq.s32.totalorder %s23, 0
      %p148 = por %p146, %p147
      %p149 = scmp.ne.s32.totalorder %s141, %s143
      %p150 = scmp.eq.s32.totalorder %s28, 1
      %p151 = por %p149, %p150
      %p152 = scmp.ne.s32.totalorder %s143, %s144
      %p153 = scmp.eq.s32.totalorder %s28, 0
      %p154 = por %p152, %p153
      %p155 = scmp.ne.s32.totalorder %s143, %s144
      %p156 = scmp.eq.s32.totalorder %s29, 1
      %p157 = por %p155, %p156
      %p159 = scmp.ne.s32.totalorder %s144, %s158
      %p160 = scmp.eq.s32.totalorder %s29, 0
      %p161 = por %p159, %p160
      %s163 = sadd.s32 %s162, 1
      %p166 = scmp.eq.s32.totalorder %s23, 1
      %p167 = scmp.ne.s32.totalorder %s162, %s164
      %p168 = scmp.eq.s32.totalorder %s23, 0
      %p169 = por %p167, %p168
      %p170 = scmp.ne.s32.totalorder %s162, %s164
      %p171 = scmp.eq.s32.totalorder %s28, 1
      %p172 = por %p170, %p171
      %p173 = scmp.ne.s32.totalorder %s164, %s165
      %p174 = scmp.eq.s32.totalorder %s28, 0
      %p175 = por %p173, %p174
      %p176 = scmp.ne.s32.totalorder %s164, %s165
      %p177 = scmp.eq.s32.totalorder %s29, 1
      %p178 = por %p176, %p177
      %p180 = scmp.ne.s32.totalorder %s165, %s179
      %p181 = scmp.eq.s32.totalorder %s29, 0
      %p182 = por %p180, %p181
      %s184 = sadd.s32 %s183, 1
      %p187 = scmp.eq.s32.totalorder %s23, 1
      %p188 = scmp.ne.s32.totalorder %s183, %s185
      %p189 = scmp.eq.s32.totalorder %s23, 0
      %p190 = por %p188, %p189
      %p191 = scmp.ne.s32.totalorder %s183, %s185
      %p192 = scmp.eq.s32.totalorder %s28, 1
      %p193 = por %p191, %p192
      %p194 = scmp.ne.s32.totalorder %s185, %s186
      %p195 = scmp.eq.s32.totalorder %s28, 0
      %p196 = por %p194, %p195
      %p197 = scmp.ne.s32.totalorder %s185, %s186
      %p198 = scmp.eq.s32.totalorder %s29, 1
      %p199 = por %p197, %p198
      %p201 = scmp.ne.s32.totalorder %s186, %s200
      %p202 = scmp.eq.s32.totalorder %s29, 0
      %p203 = por %p201, %p202
      %s205 = sadd.s32 %s204, 1
      %p208 = scmp.eq.s32.totalorder %s23, 1
      %p209 = scmp.ne.s32.totalorder %s204, %s206
      %p210 = scmp.eq.s32.totalorder %s23, 0
      %p211 = por %p209, %p210
      %p212 = scmp.ne.s32.totalorder %s204, %s206
      %p213 = scmp.eq.s32.totalorder %s28, 1
      %p214 = por %p212, %p213
      %p215 = scmp.ne.s32.totalorder %s206, %s207
      %p216 = scmp.eq.s32.totalorder %s28, 0
      %p217 = por %p215, %p216
      %p218 = scmp.ne.s32.totalorder %s206, %s207
      %p219 = scmp.eq.s32.totalorder %s29, 1
      %p220 = por %p218, %p219
      %p222 = scmp.ne.s32.totalorder %s207, %s221
      %p223 = scmp.eq.s32.totalorder %s29, 0
      %p224 = por %p222, %p223
      %s225 = ssub.s32 %s23, %s30
      %p226 = scmp.eq.s32.totalorder %s225, 0
      %s228 = sadd.s32 %s227, 1
      %s229 = scalar_select %p226, %s227, %s228
      %p232 = pneg %p226
      %p233 = scmp.eq.s32.totalorder %s23, 1
      %p234 = por %p232, %p233
      %p235 = scmp.ne.s32.totalorder %s227, %s230
      %p236 = scmp.eq.s32.totalorder %s23, 0
      %p237 = por %p235, %p236
      %p238 = scmp.ne.s32.totalorder %s227, %s230
      %p239 = scmp.eq.s32.totalorder %s28, 1
      %p240 = por %p238, %p239
      %p241 = scmp.ne.s32.totalorder %s230, %s231
      %p242 = scmp.eq.s32.totalorder %s28, 0
      %p243 = por %p241, %p242
      %p244 = scmp.ne.s32.totalorder %s230, %s231
      %p245 = scmp.eq.s32.totalorder %s29, 1
      %p246 = por %p244, %p245
      %p248 = scmp.ne.s32.totalorder %s231, %s247
      %p249 = scmp.eq.s32.totalorder %s29, 0
      %p250 = por %p248, %p249
      %p251 = scmp.le.s32.totalorder 1, %s23
      %p252 = scmp.lt.s32.totalorder %s23, 3
      %p253 = pnand %p251, %p252
      %p254 = pneg %p253
      // Predicated region
      $region9: #{tpu_custom_call.1} parent=5 // pred_check
        _
      $region10: #{tpu_custom_call.1} parent=5 // pred_check_branch
        %256 = sbr.rel (%p253) target = $region12
      $region11: #{tpu_custom_call.1} parent=5 // pred_region
        %s257 = ssub.s32 %s23, 1
        // Predicated region
        $region13: #{tpu_custom_call.1} parent=11 // pred_check
          %p258 = pneg %p70
        $region14: #{tpu_custom_call.1} parent=11 // pred_check_branch
          %260 = sbr.rel (%p258) target = $region16
        $region15: #{tpu_custom_call.1} parent=11 // pred_region
          %262 = vsyncadd [#allocation6], 0
          %s263 = sshll.u32 %s1, 4
          %s264 = int_to_ptr.hbm [resolvable:$true] %s263
          %s265 = sshll.u32 [#allocation5], 4
          %s266 = int_to_ptr.vmem [resolvable:$true] %s265
          %271 = dma.hbm_to_vmem [thread:$0]  %s264, 2048, %s266, [#allocation6], 64, 64, 4
        $region16: #{tpu_custom_call.1} parent=11 // pred_fallthru
          _
        // Predicated region
        $region17: #{tpu_custom_call.1} parent=11 // pred_check
          %p272 = pneg %p91
        $region18: #{tpu_custom_call.1} parent=11 // pred_check_branch
          %274 = sbr.rel (%p272) target = $region20
        $region19: #{tpu_custom_call.1} parent=11 // pred_region
          _
        $region20: #{tpu_custom_call.1} parent=11 // pred_fallthru
          _
        // Predicated region
        $region21: #{tpu_custom_call.1} parent=11 // pred_check
          %p275 = pneg %p112
        $region22: #{tpu_custom_call.1} parent=11 // pred_check_branch
          %277 = sbr.rel (%p275) target = $region24
        $region23: #{tpu_custom_call.1} parent=11 // pred_region
          %279 = vsyncadd [#allocation6], 0
          %s280 = sshll.u32 %s3, 4
          %s281 = int_to_ptr.hbm [resolvable:$true] %s280
          %s282 = sshll.u32 [#allocation7], 4
          %s283 = int_to_ptr.vmem [resolvable:$true] %s282
          %288 = dma.hbm_to_vmem [thread:$0]  %s281, 1024, %s283, [#allocation6], 64, 64, 4
        $region24: #{tpu_custom_call.1} parent=11 // pred_fallthru
          _
        // Predicated region
        $region25: #{tpu_custom_call.1} parent=11 // pred_check
          %p289 = pneg %p133
        $region26: #{tpu_custom_call.1} parent=11 // pred_check_branch
          %291 = sbr.rel (%p289) target = $region28
        $region27: #{tpu_custom_call.1} parent=11 // pred_region
          _
        $region28: #{tpu_custom_call.1} parent=11 // pred_fallthru
          _
        // Predicated region
        $region29: #{tpu_custom_call.1} parent=11 // pred_check
          %p292 = pneg %p154
        $region30: #{tpu_custom_call.1} parent=11 // pred_check_branch
          %294 = sbr.rel (%p292) target = $region32
        $region31: #{tpu_custom_call.1} parent=11 // pred_region
          %296 = vsyncadd [#allocation9], 0
          %s297 = sshll.u32 %s5, 4
          %s298 = int_to_ptr.hbm [resolvable:$true] %s297
          %s299 = sshll.u32 [#allocation8], 4
          %s300 = int_to_ptr.vmem [resolvable:$true] %s299
          %305 = dma.hbm_to_vmem [thread:$0]  %s298, 1024, %s300, [#allocation9], 64, 64, 4
        $region32: #{tpu_custom_call.1} parent=11 // pred_fallthru
          _
        // Predicated region
        $region33: #{tpu_custom_call.1} parent=11 // pred_check
          %p306 = pneg %p175
        $region34: #{tpu_custom_call.1} parent=11 // pred_check_branch
          %308 = sbr.rel (%p306) target = $region36
        $region35: #{tpu_custom_call.1} parent=11 // pred_region
          _
        $region36: #{tpu_custom_call.1} parent=11 // pred_fallthru
          _
        // Predicated region
        $region37: #{tpu_custom_call.1} parent=11 // pred_check
          %p309 = pneg %p196
        $region38: #{tpu_custom_call.1} parent=11 // pred_check_branch
          %311 = sbr.rel (%p309) target = $region40
        $region39: #{tpu_custom_call.1} parent=11 // pred_region
          %313 = vsyncadd [#allocation9], 0
          %s314 = sshll.u32 %s7, 4
          %s315 = int_to_ptr.hbm [resolvable:$true] %s314
          %s316 = sshll.u32 [#allocation10], 4
          %s317 = int_to_ptr.vmem [resolvable:$true] %s316
          %322 = dma.hbm_to_vmem [thread:$0]  %s315, 1024, %s317, [#allocation9], 64, 64, 4
        $region40: #{tpu_custom_call.1} parent=11 // pred_fallthru
          _
        // Predicated region
        $region41: #{tpu_custom_call.1} parent=11 // pred_check
          %p323 = pneg %p217
        $region42: #{tpu_custom_call.1} parent=11 // pred_check_branch
          %325 = sbr.rel (%p323) target = $region44
        $region43: #{tpu_custom_call.1} parent=11 // pred_region
          _
        $region44: #{tpu_custom_call.1} parent=11 // pred_fallthru
          _
      $region12: #{tpu_custom_call.1} parent=5 // pred_fallthru
        _
      %p326 = scmp.lt.s32.totalorder %s23, 2
      // Predicated region
      $region45: #{tpu_custom_call.1} parent=5 // pred_check
        %p327 = pneg %p326
      $region46: #{tpu_custom_call.1} parent=5 // pred_check_branch
        %329 = sbr.rel (%p327) target = $region48
      $region47: #{tpu_custom_call.1} parent=5 // pred_region
        // Predicated region
        $region49: #{tpu_custom_call.1} parent=47 // pred_check
          %p330 = pneg %p43
        $region50: #{tpu_custom_call.1} parent=47 // pred_check_branch
          %332 = sbr.rel (%p330) target = $region52
        $region51: #{tpu_custom_call.1} parent=47 // pred_region
          %s333 = sand.u32 %s33, 1
          %s334 = scalar_lea.sflag [#allocation3], %s333
          %s335 = sand.u32 %s33, 1
          %s336 = smul.addr %s335, 256
          %s337 = scalar_lea.vmem [#allocation2], %s336
          %s338 = smul.u32 16, %s23
          %340 = vsyncadd %s334, 0
          %s341 = smul.addr %s338, 2
          %s342 = smul.addr %s341, 8
          %s343 = scalar_lea.hbm %s0, %s342
          %s344 = sshll.u32 %s343, 4
          %s345 = int_to_ptr.hbm [resolvable:$true] %s344
          %s346 = sshll.u32 %s337, 4
          %s347 = int_to_ptr.vmem [resolvable:$true] %s346
          %352 = dma.hbm_to_vmem [thread:$0]  %s345, 4096, %s347, %s334, 256, 256, 16
        $region52: #{tpu_custom_call.1} parent=47 // pred_fallthru
          _
      $region48: #{tpu_custom_call.1} parent=5 // pred_fallthru
        _
      %p353 = scmp.le.s32.totalorder 1, %s23
      %p354 = scmp.lt.s32.totalorder %s23, 3
      %p355 = pnand %p353, %p354
      %p356 = pneg %p355
      // Predicated region
      $region53: #{tpu_custom_call.1} parent=5 // pred_check
        _
      $region54: #{tpu_custom_call.1} parent=5 // pred_check_branch
        %358 = sbr.rel (%p355) target = $region56
      $region55: #{tpu_custom_call.1} parent=5 // pred_region
        %s359 = ssub.s32 %s23, 1
        %s360 = sand.u32 %s36, 1
        %s361 = scalar_lea.sflag [#allocation3], %s360
        %s362 = sand.u32 %s36, 1
        %s363 = smul.addr %s362, 256
        %s364 = scalar_lea.vmem [#allocation2], %s363
        // Predicated region
        $region57: #{tpu_custom_call.1} parent=55 // pred_check
          %p365 = pneg %p49
        $region58: #{tpu_custom_call.1} parent=55 // pred_check_branch
          %367 = sbr.rel (%p365) target = $region60
        $region59: #{tpu_custom_call.1} parent=55 // pred_region
          %369 = dma.done %s361, 4096
        $region60: #{tpu_custom_call.1} parent=55 // pred_fallthru
          _
        // Predicated region
        $region61: #{tpu_custom_call.1} parent=55 // pred_check
          %p370 = pneg %p70
        $region62: #{tpu_custom_call.1} parent=55 // pred_check_branch
          %372 = sbr.rel (%p370) target = $region64
        $region63: #{tpu_custom_call.1} parent=55 // pred_region
          %374 = dma.done [#allocation6], 2048
        $region64: #{tpu_custom_call.1} parent=55 // pred_fallthru
          _
        // Predicated region
        $region65: #{tpu_custom_call.1} parent=55 // pred_check
          %p375 = pneg %p112
        $region66: #{tpu_custom_call.1} parent=55 // pred_check_branch
          %377 = sbr.rel (%p375) target = $region68
        $region67: #{tpu_custom_call.1} parent=55 // pred_region
          %379 = dma.done [#allocation6], 1024
        $region68: #{tpu_custom_call.1} parent=55 // pred_fallthru
          _
        // Predicated region
        $region69: #{tpu_custom_call.1} parent=55 // pred_check
          %p380 = pneg %p154
        $region70: #{tpu_custom_call.1} parent=55 // pred_check_branch
          %382 = sbr.rel (%p380) target = $region72
        $region71: #{tpu_custom_call.1} parent=55 // pred_region
          %384 = dma.done [#allocation9], 1024
        $region72: #{tpu_custom_call.1} parent=55 // pred_fallthru
          _
        // Predicated region
        $region73: #{tpu_custom_call.1} parent=55 // pred_check
          %p385 = pneg %p196
        $region74: #{tpu_custom_call.1} parent=55 // pred_check_branch
          %387 = sbr.rel (%p385) target = $region76
        $region75: #{tpu_custom_call.1} parent=55 // pred_region
          %389 = dma.done [#allocation9], 1024
        $region76: #{tpu_custom_call.1} parent=55 // pred_fallthru
          _
        %s390 = sand.u32 %s36, 1
        %s391 = scalar_lea.sflag [#allocation3], %s390
        %s392 = sand.u32 %s36, 1
        %s393 = smul.addr %s392, 256
        %s394 = scalar_lea.vmem [#allocation2], %s393
        %p395 = pneg %p49
        %p396 = pneg %p46
        %p397 = pneg %p70
        %p398 = pneg %p67
        %p399 = pneg %p91
        %p400 = pneg %p88
        %p401 = pneg %p112
        %p402 = pneg %p109
        %p403 = pneg %p133
        %p404 = pneg %p130
        %p405 = pneg %p154
        %p406 = pneg %p151
        %p407 = pneg %p175
        %p408 = pneg %p172
        %p409 = pneg %p196
        %p410 = pneg %p193
        %p411 = pneg %p217
        %p412 = pneg %p214
        %p413 = pneg %p243
        %p414 = pneg %p240
        %s415 = sand.u32 %s230, 1
        %s416 = scalar_lea.sflag [#allocation4], %s415
        %s417 = sand.u32 %s230, 1
        %s418 = smul.addr %s417, 128
        %s419 = scalar_lea.vmem [#allocation11], %s418
        %s420 = smul.u32 16, %s28
        %s421 = smul.u32 16, %s28
        %v422 = vld [vmem:[%s364] sm:$0xff]
        %v423 = vld [vmem:[%s364 + $0x8] sm:$0xff]
        %v424 = vld [vmem:[%s364 + $0x10] sm:$0xff]
        %v425 = vld [vmem:[%s364 + $0x18] sm:$0xff]
        %v426 = vld [vmem:[%s364 + $0x20] sm:$0xff]
        %v427 = vld [vmem:[%s364 + $0x28] sm:$0xff]
        %v428 = vld [vmem:[%s364 + $0x30] sm:$0xff]
        %v429 = vld [vmem:[%s364 + $0x38] sm:$0xff]
        %v430 = vld [vmem:[%s364 + $0x40] sm:$0xff]
        %v431 = vld [vmem:[%s364 + $0x48] sm:$0xff]
        %v432 = vld [vmem:[%s364 + $0x50] sm:$0xff]
        %v433 = vld [vmem:[%s364 + $0x58] sm:$0xff]
        %v434 = vld [vmem:[%s364 + $0x60] sm:$0xff]
        %v435 = vld [vmem:[%s364 + $0x68] sm:$0xff]
        %v436 = vld [vmem:[%s364 + $0x70] sm:$0xff]
        %v437 = vld [vmem:[%s364 + $0x78] sm:$0xff]
        %v438 = vld [vmem:[%s364 + $0x80] sm:$0xff]
        %v439 = vld [vmem:[%s364 + $0x88] sm:$0xff]
        %v440 = vld [vmem:[%s364 + $0x90] sm:$0xff]
        %v441 = vld [vmem:[%s364 + $0x98] sm:$0xff]
        %v442 = vld [vmem:[%s364 + $0xa0] sm:$0xff]
        %v443 = vld [vmem:[%s364 + $0xa8] sm:$0xff]
        %v444 = vld [vmem:[%s364 + $0xb0] sm:$0xff]
        %v445 = vld [vmem:[%s364 + $0xb8] sm:$0xff]
        %v446 = vld [vmem:[%s364 + $0xc0] sm:$0xff]
        %v447 = vld [vmem:[%s364 + $0xc8] sm:$0xff]
        %v448 = vld [vmem:[%s364 + $0xd0] sm:$0xff]
        %v449 = vld [vmem:[%s364 + $0xd8] sm:$0xff]
        %v450 = vld [vmem:[%s364 + $0xe0] sm:$0xff]
        %v451 = vld [vmem:[%s364 + $0xe8] sm:$0xff]
        %v452 = vld [vmem:[%s364 + $0xf0] sm:$0xff]
        %v453 = vld [vmem:[%s364 + $0xf8] sm:$0xff]
        %v454 = vpack.c.bf16 %v424, %v422
        %v455 = vpack.c.bf16 %v425, %v423
        %v456 = vpack.c.bf16 %v428, %v426
        %v457 = vpack.c.bf16 %v429, %v427
        %v458 = vpack.c.bf16 %v432, %v430
        %v459 = vpack.c.bf16 %v433, %v431
        %v460 = vpack.c.bf16 %v436, %v434
        %v461 = vpack.c.bf16 %v437, %v435
        %v462 = vpack.c.bf16 %v440, %v438
        %v463 = vpack.c.bf16 %v441, %v439
        %v464 = vpack.c.bf16 %v444, %v442
        %v465 = vpack.c.bf16 %v445, %v443
        %v466 = vpack.c.bf16 %v448, %v446
        %v467 = vpack.c.bf16 %v449, %v447
        %v468 = vpack.c.bf16 %v452, %v450
        %v469 = vpack.c.bf16 %v453, %v451
        %v470 = vld [vmem:[#allocation5] sm:$0xf]
        %v471 = vld [vmem:[#allocation5 + $0x4] sm:$0xf]
        %v472 = vld [vmem:[#allocation5 + $0x8] sm:$0xf]
        %v473 = vld [vmem:[#allocation5 + $0xc] sm:$0xf]
        %v474 = vld [vmem:[#allocation5 + $0x10] sm:$0xf]
        %v475 = vld [vmem:[#allocation5 + $0x14] sm:$0xf]
        %v476 = vld [vmem:[#allocation5 + $0x18] sm:$0xf]
        %v477 = vld [vmem:[#allocation5 + $0x1c] sm:$0xf]
        %v478 = vld [vmem:[#allocation5 + $0x20] sm:$0xf]
        %v479 = vld [vmem:[#allocation5 + $0x24] sm:$0xf]
        %v480 = vld [vmem:[#allocation5 + $0x28] sm:$0xf]
        %v481 = vld [vmem:[#allocation5 + $0x2c] sm:$0xf]
        %v482 = vld [vmem:[#allocation5 + $0x30] sm:$0xf]
        %v483 = vld [vmem:[#allocation5 + $0x34] sm:$0xf]
        %v484 = vld [vmem:[#allocation5 + $0x38] sm:$0xf]
        %v485 = vld [vmem:[#allocation5 + $0x3c] sm:$0xf]
        %v486 = vld [vmem:[#allocation5 + $0x40] sm:$0xf]
        %v487 = vld [vmem:[#allocation5 + $0x44] sm:$0xf]
        %v488 = vld [vmem:[#allocation5 + $0x48] sm:$0xf]
        %v489 = vld [vmem:[#allocation5 + $0x4c] sm:$0xf]
        %v490 = vld [vmem:[#allocation5 + $0x50] sm:$0xf]
        %v491 = vld [vmem:[#allocation5 + $0x54] sm:$0xf]
        %v492 = vld [vmem:[#allocation5 + $0x58] sm:$0xf]
        %v493 = vld [vmem:[#allocation5 + $0x5c] sm:$0xf]
        %v494 = vld [vmem:[#allocation5 + $0x60] sm:$0xf]
        %v495 = vld [vmem:[#allocation5 + $0x64] sm:$0xf]
        %v496 = vld [vmem:[#allocation5 + $0x68] sm:$0xf]
        %v497 = vld [vmem:[#allocation5 + $0x6c] sm:$0xf]
        %v498 = vld [vmem:[#allocation5 + $0x70] sm:$0xf]
        %v499 = vld [vmem:[#allocation5 + $0x74] sm:$0xf]
        %v500 = vld [vmem:[#allocation5 + $0x78] sm:$0xf]
        %v501 = vld [vmem:[#allocation5 + $0x7c] sm:$0xf]
        %v502 = vld [vmem:[%s2] sm:$0x1]
        %v504 = vperm.slane %v502, 0
        %v538 = vunpack.c.l.b16 %v470
        %v539 = vunpack.c.l.b16 %v471
        %v540 = vunpack.c.l.b16 %v472
        %v541 = vunpack.c.l.b16 %v473
        %v542 = vunpack.c.l.b16 %v474
        %v543 = vunpack.c.l.b16 %v475
        %v544 = vunpack.c.l.b16 %v476
        %v545 = vunpack.c.l.b16 %v477
        %v546 = vunpack.c.l.b16 %v478
        %v547 = vunpack.c.l.b16 %v479
        %v548 = vunpack.c.l.b16 %v480
        %v549 = vunpack.c.l.b16 %v481
        %v550 = vunpack.c.l.b16 %v482
        %v551 = vunpack.c.l.b16 %v483
        %v552 = vunpack.c.l.b16 %v484
        %v553 = vunpack.c.l.b16 %v485
        %v554 = vunpack.c.l.b16 %v486
        %v555 = vunpack.c.l.b16 %v487
        %v556 = vunpack.c.l.b16 %v488
        %v557 = vunpack.c.l.b16 %v489
        %v558 = vunpack.c.l.b16 %v490
        %v559 = vunpack.c.l.b16 %v491
        %v560 = vunpack.c.l.b16 %v492
        %v561 = vunpack.c.l.b16 %v493
        %v562 = vunpack.c.l.b16 %v494
        %v563 = vunpack.c.l.b16 %v495
        %v564 = vunpack.c.l.b16 %v496
        %v565 = vunpack.c.l.b16 %v497
        %v566 = vunpack.c.l.b16 %v498
        %v567 = vunpack.c.l.b16 %v499
        %v568 = vunpack.c.l.b16 %v500
        %v569 = vunpack.c.l.b16 %v501
        %v570 = vpack.c.b16 %v539, %v538
        %v571 = vpack.c.b16 %v541, %v540
        %v572 = vpack.c.b16 %v543, %v542
        %v573 = vpack.c.b16 %v545, %v544
        %v574 = vpack.c.b16 %v547, %v546
        %v575 = vpack.c.b16 %v549, %v548
        %v576 = vpack.c.b16 %v551, %v550
        %v577 = vpack.c.b16 %v553, %v552
        %v578 = vpack.c.b16 %v555, %v554
        %v579 = vpack.c.b16 %v557, %v556
        %v580 = vpack.c.b16 %v559, %v558
        %v581 = vpack.c.b16 %v561, %v560
        %v582 = vpack.c.b16 %v563, %v562
        %v583 = vpack.c.b16 %v565, %v564
        %v584 = vpack.c.b16 %v567, %v566
        %v585 = vpack.c.b16 %v569, %v568
        %602 = vmatpush.bf16.msra.mxu0 %v577
        %603 = vmatpush.bf16.msra.mxu0 %v576
        %604 = vmatpush.bf16.msra.mxu0 %v575
        %605 = vmatpush.bf16.msra.mxu0 %v574
        %606 = vmatpush.bf16.msra.mxu0 %v573
        %607 = vmatpush.bf16.msra.mxu0 %v572
        %608 = vmatpush.bf16.msra.mxu0 %v571
        %609 = vmatpush.bf16.msra.mxu0 %v570
        %610 = vmatmul.bf16.gmra.mxu0 %v454
        %v611 = vpop.f32.mrf.mxu0
        %v612 = vadd.f32 %v504, %v611
        %v613 = vpop.f32.mrf.mxu0
        %v614 = vadd.f32 %v504, %v613
        %615 = vmatmul.bf16.gmra.mxu0 %v456
        %v616 = vpop.f32.mrf.mxu0
        %v617 = vadd.f32 %v504, %v616
        %v618 = vpop.f32.mrf.mxu0
        %v619 = vadd.f32 %v504, %v618
        %620 = vmatmul.bf16.gmra.mxu0 %v458
        %v621 = vpop.f32.mrf.mxu0
        %v622 = vadd.f32 %v504, %v621
        %v623 = vpop.f32.mrf.mxu0
        %v624 = vadd.f32 %v504, %v623
        %625 = vmatmul.bf16.gmra.mxu0 %v460
        %v626 = vpop.f32.mrf.mxu0
        %v627 = vadd.f32 %v504, %v626
        %v628 = vpop.f32.mrf.mxu0
        %v629 = vadd.f32 %v504, %v628
        %630 = vmatmul.bf16.gmra.mxu0 %v462
        %v631 = vpop.f32.mrf.mxu0
        %v632 = vadd.f32 %v504, %v631
        %v633 = vpop.f32.mrf.mxu0
        %v634 = vadd.f32 %v504, %v633
        %635 = vmatmul.bf16.gmra.mxu0 %v464
        %v636 = vpop.f32.mrf.mxu0
        %v637 = vadd.f32 %v504, %v636
        %v638 = vpop.f32.mrf.mxu0
        %v639 = vadd.f32 %v504, %v638
        %640 = vmatmul.bf16.gmra.mxu0 %v466
        %v641 = vpop.f32.mrf.mxu0
        %v642 = vadd.f32 %v504, %v641
        %v643 = vpop.f32.mrf.mxu0
        %v644 = vadd.f32 %v504, %v643
        %645 = vmatmul.bf16.gmra.mxu0 %v468
        %v646 = vpop.f32.mrf.mxu0
        %v647 = vadd.f32 %v504, %v646
        %v648 = vpop.f32.mrf.mxu0
        %v649 = vadd.f32 %v504, %v648
        %650 = vdwg.mxu0
        %651 = vmatpush.bf16.msra.mxu0 %v585
        %652 = vmatpush.bf16.msra.mxu0 %v584
        %653 = vmatpush.bf16.msra.mxu0 %v583
        %654 = vmatpush.bf16.msra.mxu0 %v582
        %655 = vmatpush.bf16.msra.mxu0 %v581
        %656 = vmatpush.bf16.msra.mxu0 %v580
        %657 = vmatpush.bf16.msra.mxu0 %v579
        %658 = vmatpush.bf16.msra.mxu0 %v578
        %659 = vmatmul.bf16.gmra.mxu0 %v455
        %v660 = vpop.f32.mrf.mxu0
        %v661 = vadd.f32 %v612, %v660
        %v662 = vpop.f32.mrf.mxu0
        %v663 = vadd.f32 %v614, %v662
        %664 = vmatmul.bf16.gmra.mxu0 %v457
        %v665 = vpop.f32.mrf.mxu0
        %v666 = vadd.f32 %v617, %v665
        %v667 = vpop.f32.mrf.mxu0
        %v668 = vadd.f32 %v619, %v667
        %669 = vmatmul.bf16.gmra.mxu0 %v459
        %v670 = vpop.f32.mrf.mxu0
        %v671 = vadd.f32 %v622, %v670
        %v672 = vpop.f32.mrf.mxu0
        %v673 = vadd.f32 %v624, %v672
        %674 = vmatmul.bf16.gmra.mxu0 %v461
        %v675 = vpop.f32.mrf.mxu0
        %v676 = vadd.f32 %v627, %v675
        %v677 = vpop.f32.mrf.mxu0
        %v678 = vadd.f32 %v629, %v677
        %679 = vmatmul.bf16.gmra.mxu0 %v463
        %v680 = vpop.f32.mrf.mxu0
        %v681 = vadd.f32 %v632, %v680
        %v682 = vpop.f32.mrf.mxu0
        %v683 = vadd.f32 %v634, %v682
        %684 = vmatmul.bf16.gmra.mxu0 %v465
        %v685 = vpop.f32.mrf.mxu0
        %v686 = vadd.f32 %v637, %v685
        %v687 = vpop.f32.mrf.mxu0
        %v688 = vadd.f32 %v639, %v687
        %689 = vmatmul.bf16.gmra.mxu0 %v467
        %v690 = vpop.f32.mrf.mxu0
        %v691 = vadd.f32 %v642, %v690
        %v692 = vpop.f32.mrf.mxu0
        %v693 = vadd.f32 %v644, %v692
        %694 = vmatmul.bf16.gmra.mxu0 %v469
        %v695 = vpop.f32.mrf.mxu0
        %v696 = vadd.f32 %v647, %v695
        %v697 = vpop.f32.mrf.mxu0
        %v698 = vadd.f32 %v649, %v697
        %699 = vdwg.mxu0
        %v700 = vmax.f32 %v661, 0.0
        %v701 = vmax.f32 %v663, 0.0
        %v702 = vmax.f32 %v666, 0.0
        %v703 = vmax.f32 %v668, 0.0
        %v704 = vmax.f32 %v671, 0.0
        %v705 = vmax.f32 %v673, 0.0
        %v706 = vmax.f32 %v676, 0.0
        %v707 = vmax.f32 %v678, 0.0
        %v708 = vmax.f32 %v681, 0.0
        %v709 = vmax.f32 %v683, 0.0
        %v710 = vmax.f32 %v686, 0.0
        %v711 = vmax.f32 %v688, 0.0
        %v712 = vmax.f32 %v691, 0.0
        %v713 = vmax.f32 %v693, 0.0
        %v714 = vmax.f32 %v696, 0.0
        %v715 = vmax.f32 %v698, 0.0
        %v716 = vpack.c.bf16 %v701, %v700
        %v717 = vpack.c.bf16 %v703, %v702
        %v718 = vpack.c.bf16 %v705, %v704
        %v719 = vpack.c.bf16 %v707, %v706
        %v720 = vpack.c.bf16 %v709, %v708
        %v721 = vpack.c.bf16 %v711, %v710
        %v722 = vpack.c.bf16 %v713, %v712
        %v723 = vpack.c.bf16 %v715, %v714
        %v724 = vld [vmem:[#allocation7] sm:$0xf]
        %v725 = vld [vmem:[#allocation7 + $0x4] sm:$0xf]
        %v726 = vld [vmem:[#allocation7 + $0x8] sm:$0xf]
        %v727 = vld [vmem:[#allocation7 + $0xc] sm:$0xf]
        %v728 = vld [vmem:[#allocation7 + $0x10] sm:$0xf]
        %v729 = vld [vmem:[#allocation7 + $0x14] sm:$0xf]
        %v730 = vld [vmem:[#allocation7 + $0x18] sm:$0xf]
        %v731 = vld [vmem:[#allocation7 + $0x1c] sm:$0xf]
        %v732 = vld [vmem:[#allocation7 + $0x20] sm:$0xf]
        %v733 = vld [vmem:[#allocation7 + $0x24] sm:$0xf]
        %v734 = vld [vmem:[#allocation7 + $0x28] sm:$0xf]
        %v735 = vld [vmem:[#allocation7 + $0x2c] sm:$0xf]
        %v736 = vld [vmem:[#allocation7 + $0x30] sm:$0xf]
        %v737 = vld [vmem:[#allocation7 + $0x34] sm:$0xf]
        %v738 = vld [vmem:[#allocation7 + $0x38] sm:$0xf]
        %v739 = vld [vmem:[#allocation7 + $0x3c] sm:$0xf]
        %v740 = vld [vmem:[%s4] sm:$0x1]
        %v742 = vperm.slane %v740, 0
        %v760 = vunpack.c.l.b16 %v724
        %v761 = vunpack.c.l.b16 %v725
        %v762 = vunpack.c.l.b16 %v726
        %v763 = vunpack.c.l.b16 %v727
        %v764 = vunpack.c.l.b16 %v728
        %v765 = vunpack.c.l.b16 %v729
        %v766 = vunpack.c.l.b16 %v730
        %v767 = vunpack.c.l.b16 %v731
        %v768 = vunpack.c.l.b16 %v732
        %v769 = vunpack.c.l.b16 %v733
        %v770 = vunpack.c.l.b16 %v734
        %v771 = vunpack.c.l.b16 %v735
        %v772 = vunpack.c.l.b16 %v736
        %v773 = vunpack.c.l.b16 %v737
        %v774 = vunpack.c.l.b16 %v738
        %v775 = vunpack.c.l.b16 %v739
        %v776 = vpack.c.b16 %v761, %v760
        %v777 = vpack.c.b16 %v763, %v762
        %v778 = vpack.c.b16 %v765, %v764
        %v779 = vpack.c.b16 %v767, %v766
        %v780 = vpack.c.b16 %v769, %v768
        %v781 = vpack.c.b16 %v771, %v770
        %v782 = vpack.c.b16 %v773, %v772
        %v783 = vpack.c.b16 %v775, %v774
        %792 = vmatpush.bf16.msra.mxu0 %v783
        %793 = vmatpush.bf16.msra.mxu0 %v782
        %794 = vmatpush.bf16.msra.mxu0 %v781
        %795 = vmatpush.bf16.msra.mxu0 %v780
        %796 = vmatpush.bf16.msra.mxu0 %v779
        %797 = vmatpush.bf16.msra.mxu0 %v778
        %798 = vmatpush.bf16.msra.mxu0 %v777
        %799 = vmatpush.bf16.msra.mxu0 %v776
        %800 = vmatmul.bf16.gmra.mxu0 %v716
        %v801 = vpop.f32.mrf.mxu0
        %v802 = vadd.f32 %v742, %v801
        %v803 = vpop.f32.mrf.mxu0
        %v804 = vadd.f32 %v742, %v803
        %805 = vmatmul.bf16.gmra.mxu0 %v717
        %v806 = vpop.f32.mrf.mxu0
        %v807 = vadd.f32 %v742, %v806
        %v808 = vpop.f32.mrf.mxu0
        %v809 = vadd.f32 %v742, %v808
        %810 = vmatmul.bf16.gmra.mxu0 %v718
        %v811 = vpop.f32.mrf.mxu0
        %v812 = vadd.f32 %v742, %v811
        %v813 = vpop.f32.mrf.mxu0
        %v814 = vadd.f32 %v742, %v813
        %815 = vmatmul.bf16.gmra.mxu0 %v719
        %v816 = vpop.f32.mrf.mxu0
        %v817 = vadd.f32 %v742, %v816
        %v818 = vpop.f32.mrf.mxu0
        %v819 = vadd.f32 %v742, %v818
        %820 = vmatmul.bf16.gmra.mxu0 %v720
        %v821 = vpop.f32.mrf.mxu0
        %v822 = vadd.f32 %v742, %v821
        %v823 = vpop.f32.mrf.mxu0
        %v824 = vadd.f32 %v742, %v823
        %825 = vmatmul.bf16.gmra.mxu0 %v721
        %v826 = vpop.f32.mrf.mxu0
        %v827 = vadd.f32 %v742, %v826
        %v828 = vpop.f32.mrf.mxu0
        %v829 = vadd.f32 %v742, %v828
        %830 = vmatmul.bf16.gmra.mxu0 %v722
        %v831 = vpop.f32.mrf.mxu0
        %v832 = vadd.f32 %v742, %v831
        %v833 = vpop.f32.mrf.mxu0
        %v834 = vadd.f32 %v742, %v833
        %835 = vmatmul.bf16.gmra.mxu0 %v723
        %v836 = vpop.f32.mrf.mxu0
        %v837 = vadd.f32 %v742, %v836
        %v838 = vpop.f32.mrf.mxu0
        %v839 = vadd.f32 %v742, %v838
        %840 = vdwg.mxu0
        %v841 = vmax.f32 %v802, 0.0
        %v842 = vmax.f32 %v804, 0.0
        %v843 = vmax.f32 %v807, 0.0
        %v844 = vmax.f32 %v809, 0.0
        %v845 = vmax.f32 %v812, 0.0
        %v846 = vmax.f32 %v814, 0.0
        %v847 = vmax.f32 %v817, 0.0
        %v848 = vmax.f32 %v819, 0.0
        %v849 = vmax.f32 %v822, 0.0
        %v850 = vmax.f32 %v824, 0.0
        %v851 = vmax.f32 %v827, 0.0
        %v852 = vmax.f32 %v829, 0.0
        %v853 = vmax.f32 %v832, 0.0
        %v854 = vmax.f32 %v834, 0.0
        %v855 = vmax.f32 %v837, 0.0
        %v856 = vmax.f32 %v839, 0.0
        %v857 = vpack.c.bf16 %v842, %v841
        %v858 = vpack.c.bf16 %v844, %v843
        %v859 = vpack.c.bf16 %v846, %v845
        %v860 = vpack.c.bf16 %v848, %v847
        %v861 = vpack.c.bf16 %v850, %v849
        %v862 = vpack.c.bf16 %v852, %v851
        %v863 = vpack.c.bf16 %v854, %v853
        %v864 = vpack.c.bf16 %v856, %v855
        %v865 = vld [vmem:[#allocation8] sm:$0xf]
        %v866 = vld [vmem:[#allocation8 + $0x4] sm:$0xf]
        %v867 = vld [vmem:[#allocation8 + $0x8] sm:$0xf]
        %v868 = vld [vmem:[#allocation8 + $0xc] sm:$0xf]
        %v869 = vld [vmem:[#allocation8 + $0x10] sm:$0xf]
        %v870 = vld [vmem:[#allocation8 + $0x14] sm:$0xf]
        %v871 = vld [vmem:[#allocation8 + $0x18] sm:$0xf]
        %v872 = vld [vmem:[#allocation8 + $0x1c] sm:$0xf]
        %v873 = vld [vmem:[#allocation8 + $0x20] sm:$0xf]
        %v874 = vld [vmem:[#allocation8 + $0x24] sm:$0xf]
        %v875 = vld [vmem:[#allocation8 + $0x28] sm:$0xf]
        %v876 = vld [vmem:[#allocation8 + $0x2c] sm:$0xf]
        %v877 = vld [vmem:[#allocation8 + $0x30] sm:$0xf]
        %v878 = vld [vmem:[#allocation8 + $0x34] sm:$0xf]
        %v879 = vld [vmem:[#allocation8 + $0x38] sm:$0xf]
        %v880 = vld [vmem:[#allocation8 + $0x3c] sm:$0xf]
        %v881 = vld [vmem:[%s6] sm:$0x1]
        %v883 = vperm.slane %v881, 0
        %v901 = vunpack.c.l.b16 %v865
        %v902 = vunpack.c.l.b16 %v866
        %v903 = vunpack.c.l.b16 %v867
        %v904 = vunpack.c.l.b16 %v868
        %v905 = vunpack.c.l.b16 %v869
        %v906 = vunpack.c.l.b16 %v870
        %v907 = vunpack.c.l.b16 %v871
        %v908 = vunpack.c.l.b16 %v872
        %v909 = vunpack.c.l.b16 %v873
        %v910 = vunpack.c.l.b16 %v874
        %v911 = vunpack.c.l.b16 %v875
        %v912 = vunpack.c.l.b16 %v876
        %v913 = vunpack.c.l.b16 %v877
        %v914 = vunpack.c.l.b16 %v878
        %v915 = vunpack.c.l.b16 %v879
        %v916 = vunpack.c.l.b16 %v880
        %v917 = vpack.c.b16 %v902, %v901
        %v918 = vpack.c.b16 %v904, %v903
        %v919 = vpack.c.b16 %v906, %v905
        %v920 = vpack.c.b16 %v908, %v907
        %v921 = vpack.c.b16 %v910, %v909
        %v922 = vpack.c.b16 %v912, %v911
        %v923 = vpack.c.b16 %v914, %v913
        %v924 = vpack.c.b16 %v916, %v915
        %933 = vmatpush.bf16.msra.mxu0 %v924
        %934 = vmatpush.bf16.msra.mxu0 %v923
        %935 = vmatpush.bf16.msra.mxu0 %v922
        %936 = vmatpush.bf16.msra.mxu0 %v921
        %937 = vmatpush.bf16.msra.mxu0 %v920
        %938 = vmatpush.bf16.msra.mxu0 %v919
        %939 = vmatpush.bf16.msra.mxu0 %v918
        %940 = vmatpush.bf16.msra.mxu0 %v917
        %941 = vmatmul.bf16.gmra.mxu0 %v857
        %v942 = vpop.f32.mrf.mxu0
        %v943 = vadd.f32 %v883, %v942
        %v944 = vpop.f32.mrf.mxu0
        %v945 = vadd.f32 %v883, %v944
        %946 = vmatmul.bf16.gmra.mxu0 %v858
        %v947 = vpop.f32.mrf.mxu0
        %v948 = vadd.f32 %v883, %v947
        %v949 = vpop.f32.mrf.mxu0
        %v950 = vadd.f32 %v883, %v949
        %951 = vmatmul.bf16.gmra.mxu0 %v859
        %v952 = vpop.f32.mrf.mxu0
        %v953 = vadd.f32 %v883, %v952
        %v954 = vpop.f32.mrf.mxu0
        %v955 = vadd.f32 %v883, %v954
        %956 = vmatmul.bf16.gmra.mxu0 %v860
        %v957 = vpop.f32.mrf.mxu0
        %v958 = vadd.f32 %v883, %v957
        %v959 = vpop.f32.mrf.mxu0
        %v960 = vadd.f32 %v883, %v959
        %961 = vmatmul.bf16.gmra.mxu0 %v861
        %v962 = vpop.f32.mrf.mxu0
        %v963 = vadd.f32 %v883, %v962
        %v964 = vpop.f32.mrf.mxu0
        %v965 = vadd.f32 %v883, %v964
        %966 = vmatmul.bf16.gmra.mxu0 %v862
        %v967 = vpop.f32.mrf.mxu0
        %v968 = vadd.f32 %v883, %v967
        %v969 = vpop.f32.mrf.mxu0
        %v970 = vadd.f32 %v883, %v969
        %971 = vmatmul.bf16.gmra.mxu0 %v863
        %v972 = vpop.f32.mrf.mxu0
        %v973 = vadd.f32 %v883, %v972
        %v974 = vpop.f32.mrf.mxu0
        %v975 = vadd.f32 %v883, %v974
        %976 = vmatmul.bf16.gmra.mxu0 %v864
        %v977 = vpop.f32.mrf.mxu0
        %v978 = vadd.f32 %v883, %v977
        %v979 = vpop.f32.mrf.mxu0
        %v980 = vadd.f32 %v883, %v979
        %981 = vdwg.mxu0
        %v982 = vmax.f32 %v943, 0.0
        %v983 = vmax.f32 %v945, 0.0
        %v984 = vmax.f32 %v948, 0.0
        %v985 = vmax.f32 %v950, 0.0
        %v986 = vmax.f32 %v953, 0.0
        %v987 = vmax.f32 %v955, 0.0
        %v988 = vmax.f32 %v958, 0.0
        %v989 = vmax.f32 %v960, 0.0
        %v990 = vmax.f32 %v963, 0.0
        %v991 = vmax.f32 %v965, 0.0
        %v992 = vmax.f32 %v968, 0.0
        %v993 = vmax.f32 %v970, 0.0
        %v994 = vmax.f32 %v973, 0.0
        %v995 = vmax.f32 %v975, 0.0
        %v996 = vmax.f32 %v978, 0.0
        %v997 = vmax.f32 %v980, 0.0
        %v998 = vpack.c.bf16 %v983, %v982
        %v999 = vpack.c.bf16 %v985, %v984
        %v1000 = vpack.c.bf16 %v987, %v986
        %v1001 = vpack.c.bf16 %v989, %v988
        %v1002 = vpack.c.bf16 %v991, %v990
        %v1003 = vpack.c.bf16 %v993, %v992
        %v1004 = vpack.c.bf16 %v995, %v994
        %v1005 = vpack.c.bf16 %v997, %v996
        %v1006 = vld [vmem:[#allocation10] sm:$0xf]
        %v1007 = vld [vmem:[#allocation10 + $0x4] sm:$0xf]
        %v1008 = vld [vmem:[#allocation10 + $0x8] sm:$0xf]
        %v1009 = vld [vmem:[#allocation10 + $0xc] sm:$0xf]
        %v1010 = vld [vmem:[#allocation10 + $0x10] sm:$0xf]
        %v1011 = vld [vmem:[#allocation10 + $0x14] sm:$0xf]
        %v1012 = vld [vmem:[#allocation10 + $0x18] sm:$0xf]
        %v1013 = vld [vmem:[#allocation10 + $0x1c] sm:$0xf]
        %v1014 = vld [vmem:[#allocation10 + $0x20] sm:$0xf]
        %v1015 = vld [vmem:[#allocation10 + $0x24] sm:$0xf]
        %v1016 = vld [vmem:[#allocation10 + $0x28] sm:$0xf]
        %v1017 = vld [vmem:[#allocation10 + $0x2c] sm:$0xf]
        %v1018 = vld [vmem:[#allocation10 + $0x30] sm:$0xf]
        %v1019 = vld [vmem:[#allocation10 + $0x34] sm:$0xf]
        %v1020 = vld [vmem:[#allocation10 + $0x38] sm:$0xf]
        %v1021 = vld [vmem:[#allocation10 + $0x3c] sm:$0xf]
        %v1022 = vld [vmem:[%s8] sm:$0x1]
        %v1024 = vperm.slane %v1022, 0
        %v1042 = vunpack.c.l.b16 %v1006
        %v1043 = vunpack.c.l.b16 %v1007
        %v1044 = vunpack.c.l.b16 %v1008
        %v1045 = vunpack.c.l.b16 %v1009
        %v1046 = vunpack.c.l.b16 %v1010
        %v1047 = vunpack.c.l.b16 %v1011
        %v1048 = vunpack.c.l.b16 %v1012
        %v1049 = vunpack.c.l.b16 %v1013
        %v1050 = vunpack.c.l.b16 %v1014
        %v1051 = vunpack.c.l.b16 %v1015
        %v1052 = vunpack.c.l.b16 %v1016
        %v1053 = vunpack.c.l.b16 %v1017
        %v1054 = vunpack.c.l.b16 %v1018
        %v1055 = vunpack.c.l.b16 %v1019
        %v1056 = vunpack.c.l.b16 %v1020
        %v1057 = vunpack.c.l.b16 %v1021
        %v1058 = vpack.c.b16 %v1043, %v1042
        %v1059 = vpack.c.b16 %v1045, %v1044
        %v1060 = vpack.c.b16 %v1047, %v1046
        %v1061 = vpack.c.b16 %v1049, %v1048
        %v1062 = vpack.c.b16 %v1051, %v1050
        %v1063 = vpack.c.b16 %v1053, %v1052
        %v1064 = vpack.c.b16 %v1055, %v1054
        %v1065 = vpack.c.b16 %v1057, %v1056
        %1074 = vmatpush.bf16.msra.mxu0 %v1065
        %1075 = vmatpush.bf16.msra.mxu0 %v1064
        %1076 = vmatpush.bf16.msra.mxu0 %v1063
        %1077 = vmatpush.bf16.msra.mxu0 %v1062
        %1078 = vmatpush.bf16.msra.mxu0 %v1061
        %1079 = vmatpush.bf16.msra.mxu0 %v1060
        %1080 = vmatpush.bf16.msra.mxu0 %v1059
        %1081 = vmatpush.bf16.msra.mxu0 %v1058
        %1082 = vmatmul.bf16.gmra.mxu0 %v998
        %v1083 = vpop.f32.mrf.mxu0
        %v1084 = vadd.f32 %v1024, %v1083
        %v1085 = vpop.f32.mrf.mxu0
        %v1086 = vadd.f32 %v1024, %v1085
        %1087 = vmatmul.bf16.gmra.mxu0 %v999
        %v1088 = vpop.f32.mrf.mxu0
        %v1089 = vadd.f32 %v1024, %v1088
        %v1090 = vpop.f32.mrf.mxu0
        %v1091 = vadd.f32 %v1024, %v1090
        %1092 = vmatmul.bf16.gmra.mxu0 %v1000
        %v1093 = vpop.f32.mrf.mxu0
        %v1094 = vadd.f32 %v1024, %v1093
        %v1095 = vpop.f32.mrf.mxu0
        %v1096 = vadd.f32 %v1024, %v1095
        %1097 = vmatmul.bf16.gmra.mxu0 %v1001
        %v1098 = vpop.f32.mrf.mxu0
        %v1099 = vadd.f32 %v1024, %v1098
        %v1100 = vpop.f32.mrf.mxu0
        %v1101 = vadd.f32 %v1024, %v1100
        %1102 = vmatmul.bf16.gmra.mxu0 %v1002
        %v1103 = vpop.f32.mrf.mxu0
        %v1104 = vadd.f32 %v1024, %v1103
        %v1105 = vpop.f32.mrf.mxu0
        %v1106 = vadd.f32 %v1024, %v1105
        %1107 = vmatmul.bf16.gmra.mxu0 %v1003
        %v1108 = vpop.f32.mrf.mxu0
        %v1109 = vadd.f32 %v1024, %v1108
        %v1110 = vpop.f32.mrf.mxu0
        %v1111 = vadd.f32 %v1024, %v1110
        %1112 = vmatmul.bf16.gmra.mxu0 %v1004
        %v1113 = vpop.f32.mrf.mxu0
        %v1114 = vadd.f32 %v1024, %v1113
        %v1115 = vpop.f32.mrf.mxu0
        %v1116 = vadd.f32 %v1024, %v1115
        %1117 = vmatmul.bf16.gmra.mxu0 %v1005
        %v1118 = vpop.f32.mrf.mxu0
        %v1119 = vadd.f32 %v1024, %v1118
        %v1120 = vpop.f32.mrf.mxu0
        %v1121 = vadd.f32 %v1024, %v1120
        %1122 = vdwg.mxu0
        %1123 = vmax.xlane.f32.xlu0 %v1084
        %v1124 = vpop.xlane.xlu0 %1123
        %1125 = vmax.xlane.f32.xlu0 %v1086
        %v1126 = vpop.xlane.xlu0 %1125
        %1127 = vmax.xlane.f32.xlu0 %v1089
        %v1128 = vpop.xlane.xlu0 %1127
        %1129 = vmax.xlane.f32.xlu0 %v1091
        %v1130 = vpop.xlane.xlu0 %1129
        %1131 = vmax.xlane.f32.xlu0 %v1094
        %v1132 = vpop.xlane.xlu0 %1131
        %1133 = vmax.xlane.f32.xlu0 %v1096
        %v1134 = vpop.xlane.xlu0 %1133
        %1135 = vmax.xlane.f32.xlu0 %v1099
        %v1136 = vpop.xlane.xlu0 %1135
        %1137 = vmax.xlane.f32.xlu0 %v1101
        %v1138 = vpop.xlane.xlu0 %1137
        %1139 = vmax.xlane.f32.xlu0 %v1104
        %v1140 = vpop.xlane.xlu0 %1139
        %1141 = vmax.xlane.f32.xlu0 %v1106
        %v1142 = vpop.xlane.xlu0 %1141
        %1143 = vmax.xlane.f32.xlu0 %v1109
        %v1144 = vpop.xlane.xlu0 %1143
        %1145 = vmax.xlane.f32.xlu0 %v1111
        %v1146 = vpop.xlane.xlu0 %1145
        %1147 = vmax.xlane.f32.xlu0 %v1114
        %v1148 = vpop.xlane.xlu0 %1147
        %1149 = vmax.xlane.f32.xlu0 %v1116
        %v1150 = vpop.xlane.xlu0 %1149
        %1151 = vmax.xlane.f32.xlu0 %v1119
        %v1152 = vpop.xlane.xlu0 %1151
        %1153 = vmax.xlane.f32.xlu0 %v1121
        %v1154 = vpop.xlane.xlu0 %1153
        %v1155 = vsub.f32 %v1084, %v1124
        %v1156 = vsub.f32 %v1086, %v1126
        %v1157 = vsub.f32 %v1089, %v1128
        %v1158 = vsub.f32 %v1091, %v1130
        %v1159 = vsub.f32 %v1094, %v1132
        %v1160 = vsub.f32 %v1096, %v1134
        %v1161 = vsub.f32 %v1099, %v1136
        %v1162 = vsub.f32 %v1101, %v1138
        %v1163 = vsub.f32 %v1104, %v1140
        %v1164 = vsub.f32 %v1106, %v1142
        %v1165 = vsub.f32 %v1109, %v1144
        %v1166 = vsub.f32 %v1111, %v1146
        %v1167 = vsub.f32 %v1114, %v1148
        %v1168 = vsub.f32 %v1116, %v1150
        %v1169 = vsub.f32 %v1119, %v1152
        %v1170 = vsub.f32 %v1121, %v1154
        %v1171 = vmul.f32 %v1155, 1.442695
        %v1172 = vpow.pop %v1171
        %v1173 = vmul.f32 %v1156, 1.442695
        %v1174 = vpow.pop %v1173
        %v1175 = vmul.f32 %v1157, 1.442695
        %v1176 = vpow.pop %v1175
        %v1177 = vmul.f32 %v1158, 1.442695
        %v1178 = vpow.pop %v1177
        %v1179 = vmul.f32 %v1159, 1.442695
        %v1180 = vpow.pop %v1179
        %v1181 = vmul.f32 %v1160, 1.442695
        %v1182 = vpow.pop %v1181
        %v1183 = vmul.f32 %v1161, 1.442695
        %v1184 = vpow.pop %v1183
        %v1185 = vmul.f32 %v1162, 1.442695
        %v1186 = vpow.pop %v1185
        %v1187 = vmul.f32 %v1163, 1.442695
        %v1188 = vpow.pop %v1187
        %v1189 = vmul.f32 %v1164, 1.442695
        %v1190 = vpow.pop %v1189
        %v1191 = vmul.f32 %v1165, 1.442695
        %v1192 = vpow.pop %v1191
        %v1193 = vmul.f32 %v1166, 1.442695
        %v1194 = vpow.pop %v1193
        %v1195 = vmul.f32 %v1167, 1.442695
        %v1196 = vpow.pop %v1195
        %v1197 = vmul.f32 %v1168, 1.442695
        %v1198 = vpow.pop %v1197
        %v1199 = vmul.f32 %v1169, 1.442695
        %v1200 = vpow.pop %v1199
        %v1201 = vmul.f32 %v1170, 1.442695
        %v1202 = vpow.pop %v1201
        %1203 = vadd.xlane.f32.xlu0 %v1172
        %v1204 = vpop.xlane.xlu0 %1203
        %1205 = vadd.xlane.f32.xlu0 %v1174
        %v1206 = vpop.xlane.xlu0 %1205
        %1207 = vadd.xlane.f32.xlu0 %v1176
        %v1208 = vpop.xlane.xlu0 %1207
        %1209 = vadd.xlane.f32.xlu0 %v1178
        %v1210 = vpop.xlane.xlu0 %1209
        %1211 = vadd.xlane.f32.xlu0 %v1180
        %v1212 = vpop.xlane.xlu0 %1211
        %1213 = vadd.xlane.f32.xlu0 %v1182
        %v1214 = vpop.xlane.xlu0 %1213
        %1215 = vadd.xlane.f32.xlu0 %v1184
        %v1216 = vpop.xlane.xlu0 %1215
        %1217 = vadd.xlane.f32.xlu0 %v1186
        %v1218 = vpop.xlane.xlu0 %1217
        %1219 = vadd.xlane.f32.xlu0 %v1188
        %v1220 = vpop.xlane.xlu0 %1219
        %1221 = vadd.xlane.f32.xlu0 %v1190
        %v1222 = vpop.xlane.xlu0 %1221
        %1223 = vadd.xlane.f32.xlu0 %v1192
        %v1224 = vpop.xlane.xlu0 %1223
        %1225 = vadd.xlane.f32.xlu0 %v1194
        %v1226 = vpop.xlane.xlu0 %1225
        %1227 = vadd.xlane.f32.xlu0 %v1196
        %v1228 = vpop.xlane.xlu0 %1227
        %1229 = vadd.xlane.f32.xlu0 %v1198
        %v1230 = vpop.xlane.xlu0 %1229
        %1231 = vadd.xlane.f32.xlu0 %v1200
        %v1232 = vpop.xlane.xlu0 %1231
        %1233 = vadd.xlane.f32.xlu0 %v1202
        %v1234 = vpop.xlane.xlu0 %1233
        %v1235 = vlog2.pop %v1204
        %v1236 = vmul.f32 %v1235, 0.6931472
        %v1237 = vlog2.pop %v1206
        %v1238 = vmul.f32 %v1237, 0.6931472
        %v1239 = vlog2.pop %v1208
        %v1240 = vmul.f32 %v1239, 0.6931472
        %v1241 = vlog2.pop %v1210
        %v1242 = vmul.f32 %v1241, 0.6931472
        %v1243 = vlog2.pop %v1212
        %v1244 = vmul.f32 %v1243, 0.6931472
        %v1245 = vlog2.pop %v1214
        %v1246 = vmul.f32 %v1245, 0.6931472
        %v1247 = vlog2.pop %v1216
        %v1248 = vmul.f32 %v1247, 0.6931472
        %v1249 = vlog2.pop %v1218
        %v1250 = vmul.f32 %v1249, 0.6931472
        %v1251 = vlog2.pop %v1220
        %v1252 = vmul.f32 %v1251, 0.6931472
        %v1253 = vlog2.pop %v1222
        %v1254 = vmul.f32 %v1253, 0.6931472
        %v1255 = vlog2.pop %v1224
        %v1256 = vmul.f32 %v1255, 0.6931472
        %v1257 = vlog2.pop %v1226
        %v1258 = vmul.f32 %v1257, 0.6931472
        %v1259 = vlog2.pop %v1228
        %v1260 = vmul.f32 %v1259, 0.6931472
        %v1261 = vlog2.pop %v1230
        %v1262 = vmul.f32 %v1261, 0.6931472
        %v1263 = vlog2.pop %v1232
        %v1264 = vmul.f32 %v1263, 0.6931472
        %v1265 = vlog2.pop %v1234
        %v1266 = vmul.f32 %v1265, 0.6931472
        %v1267 = vsub.f32 %v1155, %v1236
        %v1268 = vsub.f32 %v1156, %v1238
        %v1269 = vsub.f32 %v1157, %v1240
        %v1270 = vsub.f32 %v1158, %v1242
        %v1271 = vsub.f32 %v1159, %v1244
        %v1272 = vsub.f32 %v1160, %v1246
        %v1273 = vsub.f32 %v1161, %v1248
        %v1274 = vsub.f32 %v1162, %v1250
        %v1275 = vsub.f32 %v1163, %v1252
        %v1276 = vsub.f32 %v1164, %v1254
        %v1277 = vsub.f32 %v1165, %v1256
        %v1278 = vsub.f32 %v1166, %v1258
        %v1279 = vsub.f32 %v1167, %v1260
        %v1280 = vsub.f32 %v1168, %v1262
        %v1281 = vsub.f32 %v1169, %v1264
        %v1282 = vsub.f32 %v1170, %v1266
        %1283 = vst [vmem:[%s419] sm:$0xff] %v1267
        %1284 = vst [vmem:[%s419 + $0x8] sm:$0xff] %v1268
        %1285 = vst [vmem:[%s419 + $0x10] sm:$0xff] %v1269
        %1286 = vst [vmem:[%s419 + $0x18] sm:$0xff] %v1270
        %1287 = vst [vmem:[%s419 + $0x20] sm:$0xff] %v1271
        %1288 = vst [vmem:[%s419 + $0x28] sm:$0xff] %v1272
        %1289 = vst [vmem:[%s419 + $0x30] sm:$0xff] %v1273
        %1290 = vst [vmem:[%s419 + $0x38] sm:$0xff] %v1274
        %1291 = vst [vmem:[%s419 + $0x40] sm:$0xff] %v1275
        %1292 = vst [vmem:[%s419 + $0x48] sm:$0xff] %v1276
        %1293 = vst [vmem:[%s419 + $0x50] sm:$0xff] %v1277
        %1294 = vst [vmem:[%s419 + $0x58] sm:$0xff] %v1278
        %1295 = vst [vmem:[%s419 + $0x60] sm:$0xff] %v1279
        %1296 = vst [vmem:[%s419 + $0x68] sm:$0xff] %v1280
        %1297 = vst [vmem:[%s419 + $0x70] sm:$0xff] %v1281
        %1298 = vst [vmem:[%s419 + $0x78] sm:$0xff] %v1282
        %s1299 = sand.u32 %s230, 1
        %s1300 = scalar_lea.sflag [#allocation4], %s1299
        %s1301 = sand.u32 %s230, 1
        %s1302 = smul.addr %s1301, 128
        %s1303 = scalar_lea.vmem [#allocation11], %s1302
        // Predicated region
        $region77: #{tpu_custom_call.1} parent=55 // pred_check
          %p1304 = pneg %p240
        $region78: #{tpu_custom_call.1} parent=55 // pred_check_branch
          %1306 = sbr.rel (%p1304) target = $region80
        $region79: #{tpu_custom_call.1} parent=55 // pred_region
          %s1307 = smul.u32 16, %s28
          %1309 = vsyncadd %s1300, 0
          %s1310 = smul.addr %s1307, 8
          %s1311 = scalar_lea.hbm %s9, %s1310
          %s1312 = sshll.u32 %s1303, 4
          %s1313 = int_to_ptr.vmem [resolvable:$true] %s1312
          %s1314 = sshll.u32 %s1311, 4
          %s1315 = int_to_ptr.hbm [resolvable:$true] %s1314
          %1320 = dma.vmem_to_hbm [thread:$0]  %s1313, 2048, %s1315, %s1300, 128, 128, 8
        $region80: #{tpu_custom_call.1} parent=55 // pred_fallthru
          _
      $region56: #{tpu_custom_call.1} parent=5 // pred_fallthru
        _
      %p1321 = scmp.le.s32.totalorder 2, %s23
      // Predicated region
      $region81: #{tpu_custom_call.1} parent=5 // pred_check
        %p1322 = pneg %p1321
      $region82: #{tpu_custom_call.1} parent=5 // pred_check_branch
        %1324 = sbr.rel (%p1322) target = $region84
      $region83: #{tpu_custom_call.1} parent=5 // pred_region
        %s1325 = ssub.s32 %s23, 2
        // Predicated region
        $region85: #{tpu_custom_call.1} parent=83 // pred_check
          %p1326 = pneg %p246
        $region86: #{tpu_custom_call.1} parent=83 // pred_check_branch
          %1328 = sbr.rel (%p1326) target = $region88
        $region87: #{tpu_custom_call.1} parent=83 // pred_region
          %s1329 = sand.u32 %s231, 1
          %s1330 = scalar_lea.sflag [#allocation4], %s1329
          %s1331 = sand.u32 %s231, 1
          %s1332 = smul.addr %s1331, 128
          %s1333 = scalar_lea.vmem [#allocation11], %s1332
          %1335 = dma.done %s1330, 2048
        $region88: #{tpu_custom_call.1} parent=83 // pred_fallthru
          _
      $region84: #{tpu_custom_call.1} parent=5 // pred_fallthru
        _
    $region6: #{tpu_custom_call.1} parent=1 // loop_footer
      %s27 = sadd.s32 1, %s23
    $region7: #{tpu_custom_call.1} parent=1 // loop_footer_branch
      %22 = sbr.rel target = $region3
    $region8: #{tpu_custom_call.1} parent=1 // loop_exit
      _
    %1336 = vsyncpa [#allocation3], 1
    %s1337 = scalar_lea.sflag [#allocation3], 1
    %1338 = vsyncpa %s1337, 1
    %1339 = vsyncpa [#allocation6], 1
    %1340 = vsyncpa [#allocation9], 1
    %1341 = vsyncpa [#allocation4], 1
    %s1342 = scalar_lea.sflag [#allocation4], 1
    %1343 = vsyncpa %s1342, 1

</llo_original>
